<compile_context>
chip_gen: v6e
topology: v6e:2x2x1
jax: 0.10.0
libtpu: 0.0.40
codegen_flags: <defaults>
</compile_context>

<pallas_src>
import functools
import math

import jax
import jax.numpy as jnp
from jax.experimental import pallas as pl
from jax.experimental.pallas import tpu as pltpu


# -----------------------------------------------------------------------------
# Fused kernel: full forward for one (model-group, batch-tile) block.
# -----------------------------------------------------------------------------
def _mlp_ensemble_kernel(*refs, n_inner, skip, tm):
    """refs layout (n_inner > 0):
        x_ref   : (tm, TB, Din)
        w1_ref  : (tm, Din, H)        b1_ref : (tm, 1, H)
        wh_ref  : (n_inner, tm, H, H) bh_ref : (n_inner, tm, 1, H)
        wo_ref  : (tm, H, Dout)       bo_ref : (tm, 1, Dout)
        o_ref   : (tm, TB, Dout)
    (when n_inner == 0 the wh/bh refs are absent)
    """
    if n_inner > 0:
        x_ref, w1_ref, b1_ref, wh_ref, bh_ref, wo_ref, bo_ref, o_ref = refs
    else:
        x_ref, w1_ref, b1_ref, wo_ref, bo_ref, o_ref = refs
        wh_ref = bh_ref = None

    for m in range(tm):  # static unroll over ensemble members in this group
        h = x_ref[m]  # (TB, Din)

        # layer 0 (layer_idx = 0, never a skip layer): relu(x @ W1 + b1)
        y = jnp.dot(h, w1_ref[m], preferred_element_type=jnp.float32) + b1_ref[m]
        h = jnp.maximum(y, 0.0)

        # hidden -> hidden layers (layer_idx = 1 .. n_inner), static unroll
        for l in range(n_inner):
            y = (
                jnp.dot(h, wh_ref[l, m], preferred_element_type=jnp.float32)
                + bh_ref[l, m]
            )
            if skip and ((l + 1) % 2):  # torch: if skip_connections and layer_idx % 2
                y = h + y
            h = jnp.maximum(y, 0.0)

        # output layer: no skip, no ReLU
        y = jnp.dot(h, wo_ref[m], preferred_element_type=jnp.float32) + bo_ref[m]
        o_ref[m] = y.astype(o_ref.dtype)


# -----------------------------------------------------------------------------
# Wrapper
# -----------------------------------------------------------------------------
def mlp_ensemble_forward(params, x, *, skip_connections,
                         models_per_block=None, batch_block=None):
    """Fused MLPEnsemble.forward — one pallas_call for the whole network."""
    n_models, batch, d_in = x.shape
    w1, b1 = params["layers"][0]
    hidden = w1.shape[-1]
    inner = params["layers"][1:]
    n_inner = len(inner)
    w_out, b_out = params["output_layer"]
    d_out = w_out.shape[-1]
    itemsize = jnp.dtype(x.dtype).itemsize

    # Batch tile: stream big batches through VMEM while the group's weights stay
    # resident (their index_map is constant along the inner batch grid axis).
    if batch_block is None:
        batch_block = batch
        for cand in (1024, 512, 256, 128):  # multiples of 8 -> sublane aligned
            if batch % cand == 0:
                batch_block = cand
                break
    tb = batch_block
    assert batch % tb == 0, "batch_block must divide batch"
    n_btiles = batch // tb

    # Per-model VMEM bytes for one grid step (activations + all params + out).
    per_model_bytes = itemsize * (
        tb * d_in
        + d_in * hidden + hidden
        + n_inner * (hidden * hidden + hidden)
        + hidden * d_out + d_out
        + tb * d_out
    )

    # Coarsen the model grid: several models per grid step, chosen so the
    # double-buffered block comfortably fits scoped VMEM (safe on v7x's 64 MiB).
    if models_per_block is None:
        models_per_block = 1
        for cand in (16, 8, 4, 2, 1):
            if n_models % cand == 0 and 2 * cand * per_model_bytes <= 24 * 1024 * 1024:
                models_per_block = cand
                break
    tm = models_per_block
    assert n_models % tm == 0, "models_per_block must divide n_models"
    n_groups = n_models // tm

    args = [x, w1, b1]
    in_specs = [
        pl.BlockSpec((tm, tb, d_in), lambda g, b: (g, b, 0)),
        pl.BlockSpec((tm, d_in, hidden), lambda g, b: (g, 0, 0)),
        pl.BlockSpec((tm, 1, hidden), lambda g, b: (g, 0, 0)),
    ]
    if n_inner > 0:
        wh = jnp.stack([w for (w, _) in inner], axis=0)  # (n_inner, n_models, H, H)
        bh = jnp.stack([b for (_, b) in inner], axis=0)  # (n_inner, n_models, 1, H)
        args += [wh, bh]
        in_specs += [
            pl.BlockSpec((n_inner, tm, hidden, hidden), lambda g, b: (0, g, 0, 0)),
            pl.BlockSpec((n_inner, tm, 1, hidden), lambda g, b: (0, g, 0, 0)),
        ]
    args += [w_out, b_out]
    in_specs += [
        pl.BlockSpec((tm, hidden, d_out), lambda g, b: (g, 0, 0)),
        pl.BlockSpec((tm, 1, d_out), lambda g, b: (g, 0, 0)),
    ]
    out_spec = pl.BlockSpec((tm, tb, d_out), lambda g, b: (g, b, 0))

    kernel = functools.partial(
        _mlp_ensemble_kernel, n_inner=n_inner, skip=bool(skip_connections), tm=tm
    )

    # Cost estimate (all layers, all models).
    flops = 2 * n_models * batch * (
        d_in * hidden + n_inner * hidden * hidden + hidden * d_out
    )
    bytes_accessed = sum(int(a.size) * jnp.dtype(a.dtype).itemsize for a in args)
    bytes_accessed += n_models * batch * d_out * itemsize
    cost = pl.CostEstimate(
        flops=flops, transcendentals=0, bytes_accessed=bytes_accessed
    )

    # Scoped VMEM limit: ~double-buffered block plus headroom, capped at 64 MiB
    # (physical VMEM per TensorCore on v7x).
    block_bytes = tm * per_model_bytes
    vmem_limit = int(min(max(3 * block_bytes, 32 * 1024 * 1024), 64 * 1024 * 1024))

    return pl.pallas_call(
        kernel,
        out_shape=jax.ShapeDtypeStruct((n_models, batch, d_out), x.dtype),
        grid_spec=pltpu.PrefetchScalarGridSpec(
            num_scalar_prefetch=0,
            grid=(n_groups, n_btiles),
            in_specs=in_specs,
            out_specs=out_spec,
        ),
        compiler_params=pltpu.CompilerParams(
            dimension_semantics=("parallel", "parallel"),
            vmem_limit_bytes=vmem_limit,
        ),
        cost_estimate=cost,
    )(*args)


# -----------------------------------------------------------------------------
# Parameter init (matches LinearEnsemble.__init__: uniform(-1/sqrt(in), 1/sqrt(in)))
# -----------------------------------------------------------------------------
def init_linear_ensemble(key, n_models, d_in, d_out, dtype=jnp.float32):
    stdv = 1.0 / math.sqrt(d_in)
    kw, kb = jax.random.split(key)
    w = jax.random.uniform(kw, (n_models, d_in, d_out), dtype, -stdv, stdv)
    b = jax.random.uniform(kb, (n_models, 1, d_out), dtype, -stdv, stdv)
    return w, b


def init_mlp_ensemble(key, n_models, input_size, hidden_size, output_size,
                      n_hidden_layers, dtype=jnp.float32):
    keys = jax.random.split(key, n_hidden_layers + 1)
    params = {"layers": [], "output_layer": None}
    params["layers"].append(
        init_linear_ensemble(keys[0], n_models, input_size, hidden_size, dtype)
    )
    for i in range(n_hidden_layers - 1):
        params["layers"].append(
            init_linear_ensemble(keys[1 + i], n_models, hidden_size, hidden_size, dtype)
        )
    params["output_layer"] = init_linear_ensemble(
        keys[-1], n_models, hidden_size, output_size, dtype
    )
    return params


# -----------------------------------------------------------------------------
# Pure-JAX reference (mirrors MLPEnsemble.forward)
# -----------------------------------------------------------------------------
def mlp_ensemble_reference(params, x, *, skip_connections):
    for layer_idx, (w, b) in enumerate(params["layers"]):
        y = jnp.einsum("mbi,mio->mbo", x, w) + b
        if skip_connections and (layer_idx % 2):
            y = x + y
        x = jnp.maximum(y, 0.0)
    w_out, b_out = params["output_layer"]
    return jnp.einsum("mbi,mio->mbo", x, w_out) + b_out


if __name__ == "__main__":
    n_models = 4
    batch = 8
    input_size = 16
    hidden_size = 32
    output_size = 8
    n_hidden_layers = 3
    skip_connections = True

    key = jax.random.PRNGKey(0)
    kx, kp = jax.random.split(key)

    x = jax.random.normal(kx, (n_models, batch, input_size), jnp.float32)
    params = init_mlp_ensemble(
        kp, n_models, input_size, hidden_size, output_size, n_hidden_layers
    )

    out = mlp_ensemble_forward(params, x, skip_connections=skip_connections)
    out = jax.block_until_ready(out)

    ref = mlp_ensemble_reference(params, x, skip_connections=skip_connections)
    assert out.shape == (n_models, batch, output_size), out.shape
    assert jnp.allclose(out, ref, atol=1e-5, rtol=1e-5), "mismatch vs reference"

    print("KERNEL_OK")
</pallas_src>

<mosaic_0001>
module attributes {stable_mosaic.version = 11 : i64} {
  func.func @_mlp_ensemble_kernel(%arg0: i32, %arg1: i32, %arg2: memref<4x8x16xf32, #tpu.memory_space<vmem>>, %arg3: memref<4x16x32xf32, #tpu.memory_space<vmem>>, %arg4: memref<4x1x32xf32, #tpu.memory_space<vmem>>, %arg5: memref<2x4x32x32xf32, #tpu.memory_space<vmem>>, %arg6: memref<2x4x1x32xf32, #tpu.memory_space<vmem>>, %arg7: memref<4x32x8xf32, #tpu.memory_space<vmem>>, %arg8: memref<4x1x8xf32, #tpu.memory_space<vmem>>, %arg9: memref<4x8x8xf32, #tpu.memory_space<vmem>>) attributes {dimension_semantics = [#tpu.dimension_semantics<parallel>, #tpu.dimension_semantics<parallel>], iteration_bounds = array<i64: 1, 1>, scalar_prefetch = 0 : i64, scratch_operands = 0 : i64, tpu.core_type = #tpu.core_type<tc>, window_params = [{transform_indices = @transform_0, window_bounds = array<i64: 4, 8, 16>}, {transform_indices = @transform_1, window_bounds = array<i64: 4, 16, 32>}, {transform_indices = @transform_2, window_bounds = array<i64: 4, 1, 32>}, {transform_indices = @transform_3, window_bounds = array<i64: 2, 4, 32, 32>}, {transform_indices = @transform_4, window_bounds = array<i64: 2, 4, 1, 32>}, {transform_indices = @transform_5, window_bounds = array<i64: 4, 32, 8>}, {transform_indices = @transform_6, window_bounds = array<i64: 4, 1, 8>}, {transform_indices = @transform_7, window_bounds = array<i64: 4, 8, 8>}]} {
    %c0 = arith.constant 0 : index
    %c0_0 = arith.constant 0 : index
    %c0_1 = arith.constant 0 : index
    %0 = vector.load %arg2[%c0, %c0_0, %c0_1] : memref<4x8x16xf32, #tpu.memory_space<vmem>>, vector<1x8x16xf32>
    %1 = vector.shape_cast %0 : vector<1x8x16xf32> to vector<8x16xf32>
    %c0_2 = arith.constant 0 : index
    %c0_3 = arith.constant 0 : index
    %c0_4 = arith.constant 0 : index
    %2 = vector.load %arg3[%c0_2, %c0_3, %c0_4] : memref<4x16x32xf32, #tpu.memory_space<vmem>>, vector<1x16x32xf32>
    %3 = vector.shape_cast %2 : vector<1x16x32xf32> to vector<16x32xf32>
    %cst = arith.constant dense<0.000000e+00> : vector<8x32xf32>
    %4 = tpu.matmul %1, %3, %cst {dimension_numbers = #tpu.dot_dimension_numbers<[1], [0], [0], [1], [0, 0, 1, 1], [], []>} : vector<8x16xf32>, vector<16x32xf32>, vector<8x32xf32> -> vector<8x32xf32>
    %c0_5 = arith.constant 0 : index
    %c0_6 = arith.constant 0 : index
    %c0_7 = arith.constant 0 : index
    %5 = vector.load %arg4[%c0_5, %c0_6, %c0_7] : memref<4x1x32xf32, #tpu.memory_space<vmem>>, vector<1x1x32xf32>
    %6 = vector.shape_cast %5 : vector<1x1x32xf32> to vector<1x32xf32>
    %7 = vector.broadcast %6 : vector<1x32xf32> to vector<8x32xf32>
    %8 = arith.addf %4, %7 : vector<8x32xf32>
    %cst_8 = arith.constant 0.000000e+00 : f32
    %9 = vector.broadcast %cst_8 : f32 to vector<8x32xf32>
    %10 = arith.maximumf %8, %9 : vector<8x32xf32>
    %c0_9 = arith.constant 0 : index
    %c0_10 = arith.constant 0 : index
    %c0_11 = arith.constant 0 : index
    %c0_12 = arith.constant 0 : index
    %11 = vector.load %arg5[%c0_9, %c0_10, %c0_11, %c0_12] : memref<2x4x32x32xf32, #tpu.memory_space<vmem>>, vector<1x1x32x32xf32>
    %12 = vector.shape_cast %11 : vector<1x1x32x32xf32> to vector<32x32xf32>
    %cst_13 = arith.constant dense<0.000000e+00> : vector<8x32xf32>
    %13 = tpu.matmul %10, %12, %cst_13 {dimension_numbers = #tpu.dot_dimension_numbers<[1], [0], [0], [1], [0, 0, 1, 1], [], []>} : vector<8x32xf32>, vector<32x32xf32>, vector<8x32xf32> -> vector<8x32xf32>
    %c0_14 = arith.constant 0 : index
    %c0_15 = arith.constant 0 : index
    %c0_16 = arith.constant 0 : index
    %c0_17 = arith.constant 0 : index
    %14 = vector.load %arg6[%c0_14, %c0_15, %c0_16, %c0_17] : memref<2x4x1x32xf32, #tpu.memory_space<vmem>>, vector<1x1x1x32xf32>
    %15 = vector.shape_cast %14 : vector<1x1x1x32xf32> to vector<1x32xf32>
    %16 = vector.broadcast %15 : vector<1x32xf32> to vector<8x32xf32>
    %17 = arith.addf %13, %16 : vector<8x32xf32>
    %18 = arith.addf %10, %17 : vector<8x32xf32>
    %cst_18 = arith.constant 0.000000e+00 : f32
    %19 = vector.broadcast %cst_18 : f32 to vector<8x32xf32>
    %20 = arith.maximumf %18, %19 : vector<8x32xf32>
    %c1 = arith.constant 1 : index
    %c0_19 = arith.constant 0 : index
    %c0_20 = arith.constant 0 : index
    %c0_21 = arith.constant 0 : index
    %21 = vector.load %arg5[%c1, %c0_19, %c0_20, %c0_21] : memref<2x4x32x32xf32, #tpu.memory_space<vmem>>, vector<1x1x32x32xf32>
    %22 = vector.shape_cast %21 : vector<1x1x32x32xf32> to vector<32x32xf32>
    %cst_22 = arith.constant dense<0.000000e+00> : vector<8x32xf32>
    %23 = tpu.matmul %20, %22, %cst_22 {dimension_numbers = #tpu.dot_dimension_numbers<[1], [0], [0], [1], [0, 0, 1, 1], [], []>} : vector<8x32xf32>, vector<32x32xf32>, vector<8x32xf32> -> vector<8x32xf32>
    %c1_23 = arith.constant 1 : index
    %c0_24 = arith.constant 0 : index
    %c0_25 = arith.constant 0 : index
    %c0_26 = arith.constant 0 : index
    %24 = vector.load %arg6[%c1_23, %c0_24, %c0_25, %c0_26] : memref<2x4x1x32xf32, #tpu.memory_space<vmem>>, vector<1x1x1x32xf32>
    %25 = vector.shape_cast %24 : vector<1x1x1x32xf32> to vector<1x32xf32>
    %26 = vector.broadcast %25 : vector<1x32xf32> to vector<8x32xf32>
    %27 = arith.addf %23, %26 : vector<8x32xf32>
    %cst_27 = arith.constant 0.000000e+00 : f32
    %28 = vector.broadcast %cst_27 : f32 to vector<8x32xf32>
    %29 = arith.maximumf %27, %28 : vector<8x32xf32>
    %c0_28 = arith.constant 0 : index
    %c0_29 = arith.constant 0 : index
    %c0_30 = arith.constant 0 : index
    %30 = vector.load %arg7[%c0_28, %c0_29, %c0_30] : memref<4x32x8xf32, #tpu.memory_space<vmem>>, vector<1x32x8xf32>
    %31 = vector.shape_cast %30 : vector<1x32x8xf32> to vector<32x8xf32>
    %cst_31 = arith.constant dense<0.000000e+00> : vector<8x8xf32>
    %32 = tpu.matmul %29, %31, %cst_31 {dimension_numbers = #tpu.dot_dimension_numbers<[1], [0], [0], [1], [0, 0, 1, 1], [], []>} : vector<8x32xf32>, vector<32x8xf32>, vector<8x8xf32> -> vector<8x8xf32>
    %c0_32 = arith.constant 0 : index
    %c0_33 = arith.constant 0 : index
    %c0_34 = arith.constant 0 : index
    %33 = vector.load %arg8[%c0_32, %c0_33, %c0_34] : memref<4x1x8xf32, #tpu.memory_space<vmem>>, vector<1x1x8xf32>
    %34 = vector.shape_cast %33 : vector<1x1x8xf32> to vector<1x8xf32>
    %35 = vector.broadcast %34 : vector<1x8xf32> to vector<8x8xf32>
    %36 = arith.addf %32, %35 : vector<8x8xf32>
    %c0_35 = arith.constant 0 : index
    %c0_36 = arith.constant 0 : index
    %c0_37 = arith.constant 0 : index
    %37 = vector.load %arg9[%c0_35, %c0_36, %c0_37] : memref<4x8x8xf32, #tpu.memory_space<vmem>>, vector<1x8x8xf32>
    %38 = vector.shape_cast %37 : vector<1x8x8xf32> to vector<8x8xf32>
    %39 = vector.shape_cast %36 : vector<8x8xf32> to vector<1x8x8xf32>
    tpu.vector_store %arg9[%c0_35, %c0_36, %c0_37], %39 {strides = array<i32>} : memref<4x8x8xf32, #tpu.memory_space<vmem>>, vector<1x8x8xf32>,
    %c1_38 = arith.constant 1 : index
    %c0_39 = arith.constant 0 : index
    %c0_40 = arith.constant 0 : index
    %40 = vector.load %arg2[%c1_38, %c0_39, %c0_40] : memref<4x8x16xf32, #tpu.memory_space<vmem>>, vector<1x8x16xf32>
    %41 = vector.shape_cast %40 : vector<1x8x16xf32> to vector<8x16xf32>
    %c1_41 = arith.constant 1 : index
    %c0_42 = arith.constant 0 : index
    %c0_43 = arith.constant 0 : index
    %42 = vector.load %arg3[%c1_41, %c0_42, %c0_43] : memref<4x16x32xf32, #tpu.memory_space<vmem>>, vector<1x16x32xf32>
    %43 = vector.shape_cast %42 : vector<1x16x32xf32> to vector<16x32xf32>
    %cst_44 = arith.constant dense<0.000000e+00> : vector<8x32xf32>
    %44 = tpu.matmul %41, %43, %cst_44 {dimension_numbers = #tpu.dot_dimension_numbers<[1], [0], [0], [1], [0, 0, 1, 1], [], []>} : vector<8x16xf32>, vector<16x32xf32>, vector<8x32xf32> -> vector<8x32xf32>
    %c1_45 = arith.constant 1 : index
    %c0_46 = arith.constant 0 : index
    %c0_47 = arith.constant 0 : index
    %45 = vector.load %arg4[%c1_45, %c0_46, %c0_47] : memref<4x1x32xf32, #tpu.memory_space<vmem>>, vector<1x1x32xf32>
    %46 = vector.shape_cast %45 : vector<1x1x32xf32> to vector<1x32xf32>
    %47 = vector.broadcast %46 : vector<1x32xf32> to vector<8x32xf32>
    %48 = arith.addf %44, %47 : vector<8x32xf32>
    %cst_48 = arith.constant 0.000000e+00 : f32
    %49 = vector.broadcast %cst_48 : f32 to vector<8x32xf32>
    %50 = arith.maximumf %48, %49 : vector<8x32xf32>
    %c0_49 = arith.constant 0 : index
    %c1_50 = arith.constant 1 : index
    %c0_51 = arith.constant 0 : index
    %c0_52 = arith.constant 0 : index
    %51 = vector.load %arg5[%c0_49, %c1_50, %c0_51, %c0_52] : memref<2x4x32x32xf32, #tpu.memory_space<vmem>>, vector<1x1x32x32xf32>
    %52 = vector.shape_cast %51 : vector<1x1x32x32xf32> to vector<32x32xf32>
    %cst_53 = arith.constant dense<0.000000e+00> : vector<8x32xf32>
    %53 = tpu.matmul %50, %52, %cst_53 {dimension_numbers = #tpu.dot_dimension_numbers<[1], [0], [0], [1], [0, 0, 1, 1], [], []>} : vector<8x32xf32>, vector<32x32xf32>, vector<8x32xf32> -> vector<8x32xf32>
    %c0_54 = arith.constant 0 : index
    %c1_55 = arith.constant 1 : index
    %c0_56 = arith.constant 0 : index
    %c0_57 = arith.constant 0 : index
    %54 = vector.load %arg6[%c0_54, %c1_55, %c0_56, %c0_57] : memref<2x4x1x32xf32, #tpu.memory_space<vmem>>, vector<1x1x1x32xf32>
    %55 = vector.shape_cast %54 : vector<1x1x1x32xf32> to vector<1x32xf32>
    %56 = vector.broadcast %55 : vector<1x32xf32> to vector<8x32xf32>
    %57 = arith.addf %53, %56 : vector<8x32xf32>
    %58 = arith.addf %50, %57 : vector<8x32xf32>
    %cst_58 = arith.constant 0.000000e+00 : f32
    %59 = vector.broadcast %cst_58 : f32 to vector<8x32xf32>
    %60 = arith.maximumf %58, %59 : vector<8x32xf32>
    %c1_59 = arith.constant 1 : index
    %c1_60 = arith.constant 1 : index
    %c0_61 = arith.constant 0 : index
    %c0_62 = arith.constant 0 : index
    %61 = vector.load %arg5[%c1_59, %c1_60, %c0_61, %c0_62] : memref<2x4x32x32xf32, #tpu.memory_space<vmem>>, vector<1x1x32x32xf32>
    %62 = vector.shape_cast %61 : vector<1x1x32x32xf32> to vector<32x32xf32>
    %cst_63 = arith.constant dense<0.000000e+00> : vector<8x32xf32>
    %63 = tpu.matmul %60, %62, %cst_63 {dimension_numbers = #tpu.dot_dimension_numbers<[1], [0], [0], [1], [0, 0, 1, 1], [], []>} : vector<8x32xf32>, vector<32x32xf32>, vector<8x32xf32> -> vector<8x32xf32>
    %c1_64 = arith.constant 1 : index
    %c1_65 = arith.constant 1 : index
    %c0_66 = arith.constant 0 : index
    %c0_67 = arith.constant 0 : index
    %64 = vector.load %arg6[%c1_64, %c1_65, %c0_66, %c0_67] : memref<2x4x1x32xf32, #tpu.memory_space<vmem>>, vector<1x1x1x32xf32>
    %65 = vector.shape_cast %64 : vector<1x1x1x32xf32> to vector<1x32xf32>
    %66 = vector.broadcast %65 : vector<1x32xf32> to vector<8x32xf32>
    %67 = arith.addf %63, %66 : vector<8x32xf32>
    %cst_68 = arith.constant 0.000000e+00 : f32
    %68 = vector.broadcast %cst_68 : f32 to vector<8x32xf32>
    %69 = arith.maximumf %67, %68 : vector<8x32xf32>
    %c1_69 = arith.constant 1 : index
    %c0_70 = arith.constant 0 : index
    %c0_71 = arith.constant 0 : index
    %70 = vector.load %arg7[%c1_69, %c0_70, %c0_71] : memref<4x32x8xf32, #tpu.memory_space<vmem>>, vector<1x32x8xf32>
    %71 = vector.shape_cast %70 : vector<1x32x8xf32> to vector<32x8xf32>
    %cst_72 = arith.constant dense<0.000000e+00> : vector<8x8xf32>
    %72 = tpu.matmul %69, %71, %cst_72 {dimension_numbers = #tpu.dot_dimension_numbers<[1], [0], [0], [1], [0, 0, 1, 1], [], []>} : vector<8x32xf32>, vector<32x8xf32>, vector<8x8xf32> -> vector<8x8xf32>
    %c1_73 = arith.constant 1 : index
    %c0_74 = arith.constant 0 : index
    %c0_75 = arith.constant 0 : index
    %73 = vector.load %arg8[%c1_73, %c0_74, %c0_75] : memref<4x1x8xf32, #tpu.memory_space<vmem>>, vector<1x1x8xf32>
    %74 = vector.shape_cast %73 : vector<1x1x8xf32> to vector<1x8xf32>
    %75 = vector.broadcast %74 : vector<1x8xf32> to vector<8x8xf32>
    %76 = arith.addf %72, %75 : vector<8x8xf32>
    %c1_76 = arith.constant 1 : index
    %c0_77 = arith.constant 0 : index
    %c0_78 = arith.constant 0 : index
    %77 = vector.load %arg9[%c1_76, %c0_77, %c0_78] : memref<4x8x8xf32, #tpu.memory_space<vmem>>, vector<1x8x8xf32>
    %78 = vector.shape_cast %77 : vector<1x8x8xf32> to vector<8x8xf32>
    %79 = vector.shape_cast %76 : vector<8x8xf32> to vector<1x8x8xf32>
    tpu.vector_store %arg9[%c1_76, %c0_77, %c0_78], %79 {strides = array<i32>} : memref<4x8x8xf32, #tpu.memory_space<vmem>>, vector<1x8x8xf32>,
    %c2 = arith.constant 2 : index
    %c0_79 = arith.constant 0 : index
    %c0_80 = arith.constant 0 : index
    %80 = vector.load %arg2[%c2, %c0_79, %c0_80] : memref<4x8x16xf32, #tpu.memory_space<vmem>>, vector<1x8x16xf32>
    %81 = vector.shape_cast %80 : vector<1x8x16xf32> to vector<8x16xf32>
    %c2_81 = arith.constant 2 : index
    %c0_82 = arith.constant 0 : index
    %c0_83 = arith.constant 0 : index
    %82 = vector.load %arg3[%c2_81, %c0_82, %c0_83] : memref<4x16x32xf32, #tpu.memory_space<vmem>>, vector<1x16x32xf32>
    %83 = vector.shape_cast %82 : vector<1x16x32xf32> to vector<16x32xf32>
    %cst_84 = arith.constant dense<0.000000e+00> : vector<8x32xf32>
    %84 = tpu.matmul %81, %83, %cst_84 {dimension_numbers = #tpu.dot_dimension_numbers<[1], [0], [0], [1], [0, 0, 1, 1], [], []>} : vector<8x16xf32>, vector<16x32xf32>, vector<8x32xf32> -> vector<8x32xf32>
    %c2_85 = arith.constant 2 : index
    %c0_86 = arith.constant 0 : index
    %c0_87 = arith.constant 0 : index
    %85 = vector.load %arg4[%c2_85, %c0_86, %c0_87] : memref<4x1x32xf32, #tpu.memory_space<vmem>>, vector<1x1x32xf32>
    %86 = vector.shape_cast %85 : vector<1x1x32xf32> to vector<1x32xf32>
    %87 = vector.broadcast %86 : vector<1x32xf32> to vector<8x32xf32>
    %88 = arith.addf %84, %87 : vector<8x32xf32>
    %cst_88 = arith.constant 0.000000e+00 : f32
    %89 = vector.broadcast %cst_88 : f32 to vector<8x32xf32>
    %90 = arith.maximumf %88, %89 : vector<8x32xf32>
    %c0_89 = arith.constant 0 : index
    %c2_90 = arith.constant 2 : index
    %c0_91 = arith.constant 0 : index
    %c0_92 = arith.constant 0 : index
    %91 = vector.load %arg5[%c0_89, %c2_90, %c0_91, %c0_92] : memref<2x4x32x32xf32, #tpu.memory_space<vmem>>, vector<1x1x32x32xf32>
    %92 = vector.shape_cast %91 : vector<1x1x32x32xf32> to vector<32x32xf32>
    %cst_93 = arith.constant dense<0.000000e+00> : vector<8x32xf32>
    %93 = tpu.matmul %90, %92, %cst_93 {dimension_numbers = #tpu.dot_dimension_numbers<[1], [0], [0], [1], [0, 0, 1, 1], [], []>} : vector<8x32xf32>, vector<32x32xf32>, vector<8x32xf32> -> vector<8x32xf32>
    %c0_94 = arith.constant 0 : index
    %c2_95 = arith.constant 2 : index
    %c0_96 = arith.constant 0 : index
    %c0_97 = arith.constant 0 : index
    %94 = vector.load %arg6[%c0_94, %c2_95, %c0_96, %c0_97] : memref<2x4x1x32xf32, #tpu.memory_space<vmem>>, vector<1x1x1x32xf32>
    %95 = vector.shape_cast %94 : vector<1x1x1x32xf32> to vector<1x32xf32>
    %96 = vector.broadcast %95 : vector<1x32xf32> to vector<8x32xf32>
    %97 = arith.addf %93, %96 : vector<8x32xf32>
    %98 = arith.addf %90, %97 : vector<8x32xf32>
    %cst_98 = arith.constant 0.000000e+00 : f32
    %99 = vector.broadcast %cst_98 : f32 to vector<8x32xf32>
    %100 = arith.maximumf %98, %99 : vector<8x32xf32>
    %c1_99 = arith.constant 1 : index
    %c2_100 = arith.constant 2 : index
    %c0_101 = arith.constant 0 : index
    %c0_102 = arith.constant 0 : index
    %101 = vector.load %arg5[%c1_99, %c2_100, %c0_101, %c0_102] : memref<2x4x32x32xf32, #tpu.memory_space<vmem>>, vector<1x1x32x32xf32>
    %102 = vector.shape_cast %101 : vector<1x1x32x32xf32> to vector<32x32xf32>
    %cst_103 = arith.constant dense<0.000000e+00> : vector<8x32xf32>
    %103 = tpu.matmul %100, %102, %cst_103 {dimension_numbers = #tpu.dot_dimension_numbers<[1], [0], [0], [1], [0, 0, 1, 1], [], []>} : vector<8x32xf32>, vector<32x32xf32>, vector<8x32xf32> -> vector<8x32xf32>
    %c1_104 = arith.constant 1 : index
    %c2_105 = arith.constant 2 : index
    %c0_106 = arith.constant 0 : index
    %c0_107 = arith.constant 0 : index
    %104 = vector.load %arg6[%c1_104, %c2_105, %c0_106, %c0_107] : memref<2x4x1x32xf32, #tpu.memory_space<vmem>>, vector<1x1x1x32xf32>
    %105 = vector.shape_cast %104 : vector<1x1x1x32xf32> to vector<1x32xf32>
    %106 = vector.broadcast %105 : vector<1x32xf32> to vector<8x32xf32>
    %107 = arith.addf %103, %106 : vector<8x32xf32>
    %cst_108 = arith.constant 0.000000e+00 : f32
    %108 = vector.broadcast %cst_108 : f32 to vector<8x32xf32>
    %109 = arith.maximumf %107, %108 : vector<8x32xf32>
    %c2_109 = arith.constant 2 : index
    %c0_110 = arith.constant 0 : index
    %c0_111 = arith.constant 0 : index
    %110 = vector.load %arg7[%c2_109, %c0_110, %c0_111] : memref<4x32x8xf32, #tpu.memory_space<vmem>>, vector<1x32x8xf32>
    %111 = vector.shape_cast %110 : vector<1x32x8xf32> to vector<32x8xf32>
    %cst_112 = arith.constant dense<0.000000e+00> : vector<8x8xf32>
    %112 = tpu.matmul %109, %111, %cst_112 {dimension_numbers = #tpu.dot_dimension_numbers<[1], [0], [0], [1], [0, 0, 1, 1], [], []>} : vector<8x32xf32>, vector<32x8xf32>, vector<8x8xf32> -> vector<8x8xf32>
    %c2_113 = arith.constant 2 : index
    %c0_114 = arith.constant 0 : index
    %c0_115 = arith.constant 0 : index
    %113 = vector.load %arg8[%c2_113, %c0_114, %c0_115] : memref<4x1x8xf32, #tpu.memory_space<vmem>>, vector<1x1x8xf32>
    %114 = vector.shape_cast %113 : vector<1x1x8xf32> to vector<1x8xf32>
    %115 = vector.broadcast %114 : vector<1x8xf32> to vector<8x8xf32>
    %116 = arith.addf %112, %115 : vector<8x8xf32>
    %c2_116 = arith.constant 2 : index
    %c0_117 = arith.constant 0 : index
    %c0_118 = arith.constant 0 : index
    %117 = vector.load %arg9[%c2_116, %c0_117, %c0_118] : memref<4x8x8xf32, #tpu.memory_space<vmem>>, vector<1x8x8xf32>
    %118 = vector.shape_cast %117 : vector<1x8x8xf32> to vector<8x8xf32>
    %119 = vector.shape_cast %116 : vector<8x8xf32> to vector<1x8x8xf32>
    tpu.vector_store %arg9[%c2_116, %c0_117, %c0_118], %119 {strides = array<i32>} : memref<4x8x8xf32, #tpu.memory_space<vmem>>, vector<1x8x8xf32>,
    %c3 = arith.constant 3 : index
    %c0_119 = arith.constant 0 : index
    %c0_120 = arith.constant 0 : index
    %120 = vector.load %arg2[%c3, %c0_119, %c0_120] : memref<4x8x16xf32, #tpu.memory_space<vmem>>, vector<1x8x16xf32>
    %121 = vector.shape_cast %120 : vector<1x8x16xf32> to vector<8x16xf32>
    %c3_121 = arith.constant 3 : index
    %c0_122 = arith.constant 0 : index
    %c0_123 = arith.constant 0 : index
    %122 = vector.load %arg3[%c3_121, %c0_122, %c0_123] : memref<4x16x32xf32, #tpu.memory_space<vmem>>, vector<1x16x32xf32>
    %123 = vector.shape_cast %122 : vector<1x16x32xf32> to vector<16x32xf32>
    %cst_124 = arith.constant dense<0.000000e+00> : vector<8x32xf32>
    %124 = tpu.matmul %121, %123, %cst_124 {dimension_numbers = #tpu.dot_dimension_numbers<[1], [0], [0], [1], [0, 0, 1, 1], [], []>} : vector<8x16xf32>, vector<16x32xf32>, vector<8x32xf32> -> vector<8x32xf32>
    %c3_125 = arith.constant 3 : index
    %c0_126 = arith.constant 0 : index
    %c0_127 = arith.constant 0 : index
    %125 = vector.load %arg4[%c3_125, %c0_126, %c0_127] : memref<4x1x32xf32, #tpu.memory_space<vmem>>, vector<1x1x32xf32>
    %126 = vector.shape_cast %125 : vector<1x1x32xf32> to vector<1x32xf32>
    %127 = vector.broadcast %126 : vector<1x32xf32> to vector<8x32xf32>
    %128 = arith.addf %124, %127 : vector<8x32xf32>
    %cst_128 = arith.constant 0.000000e+00 : f32
    %129 = vector.broadcast %cst_128 : f32 to vector<8x32xf32>
    %130 = arith.maximumf %128, %129 : vector<8x32xf32>
    %c0_129 = arith.constant 0 : index
    %c3_130 = arith.constant 3 : index
    %c0_131 = arith.constant 0 : index
    %c0_132 = arith.constant 0 : index
    %131 = vector.load %arg5[%c0_129, %c3_130, %c0_131, %c0_132] : memref<2x4x32x32xf32, #tpu.memory_space<vmem>>, vector<1x1x32x32xf32>
    %132 = vector.shape_cast %131 : vector<1x1x32x32xf32> to vector<32x32xf32>
    %cst_133 = arith.constant dense<0.000000e+00> : vector<8x32xf32>
    %133 = tpu.matmul %130, %132, %cst_133 {dimension_numbers = #tpu.dot_dimension_numbers<[1], [0], [0], [1], [0, 0, 1, 1], [], []>} : vector<8x32xf32>, vector<32x32xf32>, vector<8x32xf32> -> vector<8x32xf32>
    %c0_134 = arith.constant 0 : index
    %c3_135 = arith.constant 3 : index
    %c0_136 = arith.constant 0 : index
    %c0_137 = arith.constant 0 : index
    %134 = vector.load %arg6[%c0_134, %c3_135, %c0_136, %c0_137] : memref<2x4x1x32xf32, #tpu.memory_space<vmem>>, vector<1x1x1x32xf32>
    %135 = vector.shape_cast %134 : vector<1x1x1x32xf32> to vector<1x32xf32>
    %136 = vector.broadcast %135 : vector<1x32xf32> to vector<8x32xf32>
    %137 = arith.addf %133, %136 : vector<8x32xf32>
    %138 = arith.addf %130, %137 : vector<8x32xf32>
    %cst_138 = arith.constant 0.000000e+00 : f32
    %139 = vector.broadcast %cst_138 : f32 to vector<8x32xf32>
    %140 = arith.maximumf %138, %139 : vector<8x32xf32>
    %c1_139 = arith.constant 1 : index
    %c3_140 = arith.constant 3 : index
    %c0_141 = arith.constant 0 : index
    %c0_142 = arith.constant 0 : index
    %141 = vector.load %arg5[%c1_139, %c3_140, %c0_141, %c0_142] : memref<2x4x32x32xf32, #tpu.memory_space<vmem>>, vector<1x1x32x32xf32>
    %142 = vector.shape_cast %141 : vector<1x1x32x32xf32> to vector<32x32xf32>
    %cst_143 = arith.constant dense<0.000000e+00> : vector<8x32xf32>
    %143 = tpu.matmul %140, %142, %cst_143 {dimension_numbers = #tpu.dot_dimension_numbers<[1], [0], [0], [1], [0, 0, 1, 1], [], []>} : vector<8x32xf32>, vector<32x32xf32>, vector<8x32xf32> -> vector<8x32xf32>
    %c1_144 = arith.constant 1 : index
    %c3_145 = arith.constant 3 : index
    %c0_146 = arith.constant 0 : index
    %c0_147 = arith.constant 0 : index
    %144 = vector.load %arg6[%c1_144, %c3_145, %c0_146, %c0_147] : memref<2x4x1x32xf32, #tpu.memory_space<vmem>>, vector<1x1x1x32xf32>
    %145 = vector.shape_cast %144 : vector<1x1x1x32xf32> to vector<1x32xf32>
    %146 = vector.broadcast %145 : vector<1x32xf32> to vector<8x32xf32>
    %147 = arith.addf %143, %146 : vector<8x32xf32>
    %cst_148 = arith.constant 0.000000e+00 : f32
    %148 = vector.broadcast %cst_148 : f32 to vector<8x32xf32>
    %149 = arith.maximumf %147, %148 : vector<8x32xf32>
    %c3_149 = arith.constant 3 : index
    %c0_150 = arith.constant 0 : index
    %c0_151 = arith.constant 0 : index
    %150 = vector.load %arg7[%c3_149, %c0_150, %c0_151] : memref<4x32x8xf32, #tpu.memory_space<vmem>>, vector<1x32x8xf32>
    %151 = vector.shape_cast %150 : vector<1x32x8xf32> to vector<32x8xf32>
    %cst_152 = arith.constant dense<0.000000e+00> : vector<8x8xf32>
    %152 = tpu.matmul %149, %151, %cst_152 {dimension_numbers = #tpu.dot_dimension_numbers<[1], [0], [0], [1], [0, 0, 1, 1], [], []>} : vector<8x32xf32>, vector<32x8xf32>, vector<8x8xf32> -> vector<8x8xf32>
    %c3_153 = arith.constant 3 : index
    %c0_154 = arith.constant 0 : index
    %c0_155 = arith.constant 0 : index
    %153 = vector.load %arg8[%c3_153, %c0_154, %c0_155] : memref<4x1x8xf32, #tpu.memory_space<vmem>>, vector<1x1x8xf32>
    %154 = vector.shape_cast %153 : vector<1x1x8xf32> to vector<1x8xf32>
    %155 = vector.broadcast %154 : vector<1x8xf32> to vector<8x8xf32>
    %156 = arith.addf %152, %155 : vector<8x8xf32>
    %c3_156 = arith.constant 3 : index
    %c0_157 = arith.constant 0 : index
    %c0_158 = arith.constant 0 : index
    %157 = vector.load %arg9[%c3_156, %c0_157, %c0_158] : memref<4x8x8xf32, #tpu.memory_space<vmem>>, vector<1x8x8xf32>
    %158 = vector.shape_cast %157 : vector<1x8x8xf32> to vector<8x8xf32>
    %159 = vector.shape_cast %156 : vector<8x8xf32> to vector<1x8x8xf32>
    tpu.vector_store %arg9[%c3_156, %c0_157, %c0_158], %159 {strides = array<i32>} : memref<4x8x8xf32, #tpu.memory_space<vmem>>, vector<1x8x8xf32>,
    return
  }
  func.func @transform_0(%arg0: i32, %arg1: i32) -> (i32, i32, i32) {
    %c0_i32 = arith.constant 0 : i32
    %c0_i32_0 = arith.constant 0 : i32
    return %arg0, %arg1, %c0_i32 : i32, i32, i32
  }
  func.func @transform_1(%arg0: i32, %arg1: i32) -> (i32, i32, i32) {
    %c0_i32 = arith.constant 0 : i32
    %c0_i32_0 = arith.constant 0 : i32
    %c0_i32_1 = arith.constant 0 : i32
    return %arg0, %c0_i32, %c0_i32_0 : i32, i32, i32
  }
  func.func @transform_2(%arg0: i32, %arg1: i32) -> (i32, i32, i32) {
    %c0_i32 = arith.constant 0 : i32
    %c0_i32_0 = arith.constant 0 : i32
    %c0_i32_1 = arith.constant 0 : i32
    return %arg0, %c0_i32, %c0_i32_0 : i32, i32, i32
  }
  func.func @transform_3(%arg0: i32, %arg1: i32) -> (i32, i32, i32, i32) {
    %c0_i32 = arith.constant 0 : i32
    %c0_i32_0 = arith.constant 0 : i32
    %c0_i32_1 = arith.constant 0 : i32
    %c0_i32_2 = arith.constant 0 : i32
    return %c0_i32, %arg0, %c0_i32_0, %c0_i32_1 : i32, i32, i32, i32
  }
  func.func @transform_4(%arg0: i32, %arg1: i32) -> (i32, i32, i32, i32) {
    %c0_i32 = arith.constant 0 : i32
    %c0_i32_0 = arith.constant 0 : i32
    %c0_i32_1 = arith.constant 0 : i32
    %c0_i32_2 = arith.constant 0 : i32
    return %c0_i32, %arg0, %c0_i32_0, %c0_i32_1 : i32, i32, i32, i32
  }
  func.func @transform_5(%arg0: i32, %arg1: i32) -> (i32, i32, i32) {
    %c0_i32 = arith.constant 0 : i32
    %c0_i32_0 = arith.constant 0 : i32
    %c0_i32_1 = arith.constant 0 : i32
    return %arg0, %c0_i32, %c0_i32_0 : i32, i32, i32
  }
  func.func @transform_6(%arg0: i32, %arg1: i32) -> (i32, i32, i32) {
    %c0_i32 = arith.constant 0 : i32
    %c0_i32_0 = arith.constant 0 : i32
    %c0_i32_1 = arith.constant 0 : i32
    return %arg0, %c0_i32, %c0_i32_0 : i32, i32, i32
  }
  func.func @transform_7(%arg0: i32, %arg1: i32) -> (i32, i32, i32) {
    %c0_i32 = arith.constant 0 : i32
    %c0_i32_0 = arith.constant 0 : i32
    return %arg0, %arg1, %c0_i32 : i32, i32, i32
  }
}

</mosaic_0001>

<llo_original>
// kernel: tpu_custom_call.1
$region0: #{tpu_custom_call.1}
  #allocation0 [shape = 'u32[]', space=smem, size = 0x4, offset = 0x4, fixed_abs, tag = 'smem constant byte address 0x4 - core index']
  #allocation1 [shape = 'u32[144,128]{1,0:T(1,128)}', space=vmem, size = 0x12000, scoped, tag = 'internal scratch']
  %s0 = inlined_call_operand.vmem [shape: f32[4,8,16], index: 0, kind: input, shape index: {}]
  %s1 = inlined_call_operand.vmem [shape: f32[4,16,32], index: 1, kind: input, shape index: {}]
  %s2 = inlined_call_operand.vmem [shape: f32[4,1,32], index: 2, kind: input, shape index: {}]
  %s3 = inlined_call_operand.hbm [shape: f32[2,4,32,32], index: 3, kind: input, shape index: {}]
  %s4 = inlined_call_operand.vmem [shape: f32[2,4,1,32], index: 4, kind: input, shape index: {}]
  %s5 = inlined_call_operand.vmem [shape: f32[4,32,8], index: 5, kind: input, shape index: {}]
  %s6 = inlined_call_operand.vmem [shape: f32[4,1,8], index: 6, kind: input, shape index: {}]
  %s7 = inlined_call_operand.hbm [shape: f32[4,8,8], index: 7, kind: output, shape index: {}]
  %s8 = sld [smem:[#allocation0]]
  $region42: #{tpu_custom_call.1} parent=0
    _
  %s10 = ssub.s32 1, %s8
  %s11 = scalar_select 0, %s10, %s8
  $region1: #{tpu_custom_call.1} parent=0
    #allocation2 [shape = 'u8[131072]{0}', space=vmem, size = 0x20000, scoped, tag = 'input window, operand 3, single buffered']
    #allocation3 [shape = 's32[1]{0}', space=sflag, size = 0x4, scoped, tag = 'scoped memory for tpu_custom_call.1']
    #allocation4 [shape = 's32[1]{0}', space=sflag, size = 0x4, scoped, tag = 'scoped memory for tpu_custom_call.1']
    #allocation5 [shape = 'u8[16384]{0}', space=vmem, size = 0x4000, scoped, tag = 'output window, operand 0, single buffered']
    %12 = vsyncpa [#allocation3], 0
    %13 = vsyncpa [#allocation4], 0
    // Predicated region
    $region2: #{tpu_custom_call.1} parent=1 // pred_check
      _
    $region3: #{tpu_custom_call.1} parent=1 // pred_check_branch
      %15 = sbr.rel (0) target = $region5
    $region4: #{tpu_custom_call.1} parent=1 // pred_region
      _
    $region5: #{tpu_custom_call.1} parent=1 // pred_fallthru
      _
    // Predicated region
    $region6: #{tpu_custom_call.1} parent=1 // pred_check
      _
    $region7: #{tpu_custom_call.1} parent=1 // pred_check_branch
      %17 = sbr.rel (0) target = $region9
    $region8: #{tpu_custom_call.1} parent=1 // pred_region
      _
    $region9: #{tpu_custom_call.1} parent=1 // pred_fallthru
      _
    // Predicated region
    $region10: #{tpu_custom_call.1} parent=1 // pred_check
      _
    $region11: #{tpu_custom_call.1} parent=1 // pred_check_branch
      %19 = sbr.rel (0) target = $region13
    $region12: #{tpu_custom_call.1} parent=1 // pred_region
      _
    $region13: #{tpu_custom_call.1} parent=1 // pred_fallthru
      _
    // Predicated region
    $region14: #{tpu_custom_call.1} parent=1 // pred_check
      _
    $region15: #{tpu_custom_call.1} parent=1 // pred_check_branch
      %21 = sbr.rel (0) target = $region17
    $region16: #{tpu_custom_call.1} parent=1 // pred_region
      %s23 = ssub.s32 4096, 4096
      %24 = vsyncadd [#allocation3], %s23
      %s25 = sshll.u32 [#allocation2], 4
      %s26 = int_to_ptr.vmem [resolvable:$true] %s25
      %31 = dma.hbm_to_vmem [thread:$0]  %s3, 4096, %s26, [#allocation3], 128, 128, 8
    $region17: #{tpu_custom_call.1} parent=1 // pred_fallthru
      _
    // Predicated region
    $region18: #{tpu_custom_call.1} parent=1 // pred_check
      _
    $region19: #{tpu_custom_call.1} parent=1 // pred_check_branch
      %33 = sbr.rel (0) target = $region21
    $region20: #{tpu_custom_call.1} parent=1 // pred_region
      _
    $region21: #{tpu_custom_call.1} parent=1 // pred_fallthru
      _
    // Predicated region
    $region22: #{tpu_custom_call.1} parent=1 // pred_check
      _
    $region23: #{tpu_custom_call.1} parent=1 // pred_check_branch
      %35 = sbr.rel (0) target = $region25
    $region24: #{tpu_custom_call.1} parent=1 // pred_region
      _
    $region25: #{tpu_custom_call.1} parent=1 // pred_fallthru
      _
    // Predicated region
    $region26: #{tpu_custom_call.1} parent=1 // pred_check
      _
    $region27: #{tpu_custom_call.1} parent=1 // pred_check_branch
      %37 = sbr.rel (0) target = $region29
    $region28: #{tpu_custom_call.1} parent=1 // pred_region
      _
    $region29: #{tpu_custom_call.1} parent=1 // pred_fallthru
      _
    // Predicated region
    $region30: #{tpu_custom_call.1} parent=1 // pred_check
      _
    $region31: #{tpu_custom_call.1} parent=1 // pred_check_branch
      %39 = sbr.rel (0) target = $region33
    $region32: #{tpu_custom_call.1} parent=1 // pred_region
      %40 = dma.done [#allocation3], 4096
    $region33: #{tpu_custom_call.1} parent=1 // pred_fallthru
      _
    %v41 = vld [vmem:[%s0] sm:$0xff]
    %v42 = vld [vmem:[%s1] sm:$0xff]
    %v43 = vld [vmem:[%s1 + $0x8] sm:$0xff]
    %v44 = vld [vmem:[%s2] sm:$0x1]
    %v46 = vlaneseq
    %v47 = vshrl.u32 %v46, 7
    %v48 = vsub.s32 0, %v47
    %v49 = vrot.slane %v44, %v48
    %vm51 = vcmask 130048
    %v53 = vsel %vm51, %v41, 0
    %55 = vmatprep.subr.mxu0 0.0
    %56 = vmatpush1.msra.mxu0 0.0
    %57 = vmatprep.subr.mxu0 0.0
    %58 = vmatpush1.msra.mxu0 0.0
    %59 = vmatprep.subr.mxu0 0.0
    %60 = vmatpush1.msra.mxu0 0.0
    %61 = vmatprep.subr.mxu0 0.0
    %62 = vmatpush1.msra.mxu0 0.0
    %63 = vmatprep.subr.mxu0 0.0
    %64 = vmatpush1.msra.mxu0 0.0
    %65 = vmatprep.subr.mxu0 0.0
    %66 = vmatpush1.msra.mxu0 0.0
    %67 = vmatprep.subr.mxu0 0.0
    %68 = vmatpush1.msra.mxu0 0.0
    %69 = vmatprep.subr.mxu0 0.0
    %70 = vmatpush1.msra.mxu0 0.0
    %71 = vmatprep.subr.mxu0 0.0
    %72 = vmatpush1.msra.mxu0 0.0
    %73 = vmatprep.subr.mxu0 0.0
    %74 = vmatpush1.msra.mxu0 0.0
    %75 = vmatprep.subr.mxu0 0.0
    %76 = vmatpush1.msra.mxu0 0.0
    %77 = vmatprep.subr.mxu0 0.0
    %78 = vmatpush1.msra.mxu0 0.0
    %79 = vmatprep.subr.mxu0 0.0
    %80 = vmatpush1.msra.mxu0 0.0
    %81 = vmatprep.subr.mxu0 0.0
    %82 = vmatpush1.msra.mxu0 0.0
    %83 = vmatprep.subr.mxu0 0.0
    %84 = vmatpush1.msra.mxu0 %v43
    %85 = vmatprep.subr.mxu0 0.0
    %86 = vmatpush1.msra.mxu0 %v42
    %87 = vmatprep.subr.mxu0 0.0
    %88 = vmatpush2.msra.mxu0 0.0
    %89 = vmatprep.subr.mxu0 0.0
    %90 = vmatpush2.msra.mxu0 0.0
    %91 = vmatprep.subr.mxu0 0.0
    %92 = vmatpush2.msra.mxu0 0.0
    %93 = vmatprep.subr.mxu0 0.0
    %94 = vmatpush2.msra.mxu0 0.0
    %95 = vmatprep.subr.mxu0 0.0
    %96 = vmatpush2.msra.mxu0 0.0
    %97 = vmatprep.subr.mxu0 0.0
    %98 = vmatpush2.msra.mxu0 0.0
    %99 = vmatprep.subr.mxu0 0.0
    %100 = vmatpush2.msra.mxu0 0.0
    %101 = vmatprep.subr.mxu0 0.0
    %102 = vmatpush2.msra.mxu0 0.0
    %103 = vmatprep.subr.mxu0 0.0
    %104 = vmatpush2.msra.mxu0 0.0
    %105 = vmatprep.subr.mxu0 0.0
    %106 = vmatpush2.msra.mxu0 0.0
    %107 = vmatprep.subr.mxu0 0.0
    %108 = vmatpush2.msra.mxu0 0.0
    %109 = vmatprep.subr.mxu0 0.0
    %110 = vmatpush2.msra.mxu0 0.0
    %111 = vmatprep.subr.mxu0 0.0
    %112 = vmatpush2.msra.mxu0 0.0
    %113 = vmatprep.subr.mxu0 0.0
    %114 = vmatpush2.msra.mxu0 0.0
    %115 = vmatprep.subr.mxu0 0.0
    %116 = vmatpush2.msra.mxu0 0.0
    %117 = vmatprep.subr.mxu0 0.0
    %118 = vmatpush2.msra.mxu0 0.0
    %119 = vmatprep.mubr.f32.mxu0 0.0
    %120 = vmatmul.mubr.f32.gmra.mxu0 %v53
    %v121 = vpop.f32.mrf.mxu0
    %v122 = vadd.f32 %v49, %v121
    %v123 = vpop.f32.mrf.mxu0
    %124 = vdwg.mxu0
    %v125 = vmax.f32 %v122, 0.0
    %v126 = vld [vmem:[#allocation2] sm:$0xff]
    %v127 = vld [vmem:[#allocation2 + $0x8] sm:$0xff]
    %v128 = vld [vmem:[#allocation2 + $0x10] sm:$0xff]
    %v129 = vld [vmem:[#allocation2 + $0x18] sm:$0xff]
    %v130 = vld [vmem:[%s4] sm:$0x1]
    %v132 = vlaneseq
    %v133 = vshrl.u32 %v132, 7
    %v134 = vsub.s32 0, %v133
    %v135 = vrot.slane %v130, %v134
    %vm137 = vcmask 261120
    %v139 = vsel %vm137, %v125, 0
    %141 = vmatprep.subr.mxu0 0.0
    %142 = vmatpush1.msra.mxu0 0.0
    %143 = vmatprep.subr.mxu0 0.0
    %144 = vmatpush1.msra.mxu0 0.0
    %145 = vmatprep.subr.mxu0 0.0
    %146 = vmatpush1.msra.mxu0 0.0
    %147 = vmatprep.subr.mxu0 0.0
    %148 = vmatpush1.msra.mxu0 0.0
    %149 = vmatprep.subr.mxu0 0.0
    %150 = vmatpush1.msra.mxu0 0.0
    %151 = vmatprep.subr.mxu0 0.0
    %152 = vmatpush1.msra.mxu0 0.0
    %153 = vmatprep.subr.mxu0 0.0
    %154 = vmatpush1.msra.mxu0 0.0
    %155 = vmatprep.subr.mxu0 0.0
    %156 = vmatpush1.msra.mxu0 0.0
    %157 = vmatprep.subr.mxu0 0.0
    %158 = vmatpush1.msra.mxu0 0.0
    %159 = vmatprep.subr.mxu0 0.0
    %160 = vmatpush1.msra.mxu0 0.0
    %161 = vmatprep.subr.mxu0 0.0
    %162 = vmatpush1.msra.mxu0 0.0
    %163 = vmatprep.subr.mxu0 0.0
    %164 = vmatpush1.msra.mxu0 0.0
    %165 = vmatprep.subr.mxu0 0.0
    %166 = vmatpush1.msra.mxu0 %v129
    %167 = vmatprep.subr.mxu0 0.0
    %168 = vmatpush1.msra.mxu0 %v128
    %169 = vmatprep.subr.mxu0 0.0
    %170 = vmatpush1.msra.mxu0 %v127
    %171 = vmatprep.subr.mxu0 0.0
    %172 = vmatpush1.msra.mxu0 %v126
    %173 = vmatprep.subr.mxu0 0.0
    %174 = vmatpush2.msra.mxu0 0.0
    %175 = vmatprep.subr.mxu0 0.0
    %176 = vmatpush2.msra.mxu0 0.0
    %177 = vmatprep.subr.mxu0 0.0
    %178 = vmatpush2.msra.mxu0 0.0
    %179 = vmatprep.subr.mxu0 0.0
    %180 = vmatpush2.msra.mxu0 0.0
    %181 = vmatprep.subr.mxu0 0.0
    %182 = vmatpush2.msra.mxu0 0.0
    %183 = vmatprep.subr.mxu0 0.0
    %184 = vmatpush2.msra.mxu0 0.0
    %185 = vmatprep.subr.mxu0 0.0
    %186 = vmatpush2.msra.mxu0 0.0
    %187 = vmatprep.subr.mxu0 0.0
    %188 = vmatpush2.msra.mxu0 0.0
    %189 = vmatprep.subr.mxu0 0.0
    %190 = vmatpush2.msra.mxu0 0.0
    %191 = vmatprep.subr.mxu0 0.0
    %192 = vmatpush2.msra.mxu0 0.0
    %193 = vmatprep.subr.mxu0 0.0
    %194 = vmatpush2.msra.mxu0 0.0
    %195 = vmatprep.subr.mxu0 0.0
    %196 = vmatpush2.msra.mxu0 0.0
    %197 = vmatprep.subr.mxu0 0.0
    %198 = vmatpush2.msra.mxu0 0.0
    %199 = vmatprep.subr.mxu0 0.0
    %200 = vmatpush2.msra.mxu0 0.0
    %201 = vmatprep.subr.mxu0 0.0
    %202 = vmatpush2.msra.mxu0 0.0
    %203 = vmatprep.subr.mxu0 0.0
    %204 = vmatpush2.msra.mxu0 0.0
    %205 = vmatprep.mubr.f32.mxu0 0.0
    %206 = vmatmul.mubr.f32.gmra.mxu0 %v139
    %v207 = vpop.f32.mrf.mxu0
    %v208 = vadd.f32 %v135, %v207
    %v209 = vpop.f32.mrf.mxu0
    %210 = vdwg.mxu0
    %v211 = vadd.f32 %v125, %v208
    %v212 = vmax.f32 %v211, 0.0
    %s213 = scalar_lea.vmem [#allocation2], 128
    %v214 = vld [vmem:[%s213] sm:$0xff]
    %v215 = vld [vmem:[%s213 + $0x8] sm:$0xff]
    %v216 = vld [vmem:[%s213 + $0x10] sm:$0xff]
    %v217 = vld [vmem:[%s213 + $0x18] sm:$0xff]
    %s218 = scalar_lea.vmem %s4, 4
    %v219 = vld [vmem:[%s218] sm:$0x1]
    %v221 = vlaneseq
    %v222 = vshrl.u32 %v221, 7
    %v223 = vsub.s32 0, %v222
    %v224 = vrot.slane %v219, %v223
    %v227 = vsel %vm137, %v212, 0
    %229 = vmatprep.subr.mxu0 0.0
    %230 = vmatpush1.msra.mxu0 0.0
    %231 = vmatprep.subr.mxu0 0.0
    %232 = vmatpush1.msra.mxu0 0.0
    %233 = vmatprep.subr.mxu0 0.0
    %234 = vmatpush1.msra.mxu0 0.0
    %235 = vmatprep.subr.mxu0 0.0
    %236 = vmatpush1.msra.mxu0 0.0
    %237 = vmatprep.subr.mxu0 0.0
    %238 = vmatpush1.msra.mxu0 0.0
    %239 = vmatprep.subr.mxu0 0.0
    %240 = vmatpush1.msra.mxu0 0.0
    %241 = vmatprep.subr.mxu0 0.0
    %242 = vmatpush1.msra.mxu0 0.0
    %243 = vmatprep.subr.mxu0 0.0
    %244 = vmatpush1.msra.mxu0 0.0
    %245 = vmatprep.subr.mxu0 0.0
    %246 = vmatpush1.msra.mxu0 0.0
    %247 = vmatprep.subr.mxu0 0.0
    %248 = vmatpush1.msra.mxu0 0.0
    %249 = vmatprep.subr.mxu0 0.0
    %250 = vmatpush1.msra.mxu0 0.0
    %251 = vmatprep.subr.mxu0 0.0
    %252 = vmatpush1.msra.mxu0 0.0
    %253 = vmatprep.subr.mxu0 0.0
    %254 = vmatpush1.msra.mxu0 %v217
    %255 = vmatprep.subr.mxu0 0.0
    %256 = vmatpush1.msra.mxu0 %v216
    %257 = vmatprep.subr.mxu0 0.0
    %258 = vmatpush1.msra.mxu0 %v215
    %259 = vmatprep.subr.mxu0 0.0
    %260 = vmatpush1.msra.mxu0 %v214
    %261 = vmatprep.subr.mxu0 0.0
    %262 = vmatpush2.msra.mxu0 0.0
    %263 = vmatprep.subr.mxu0 0.0
    %264 = vmatpush2.msra.mxu0 0.0
    %265 = vmatprep.subr.mxu0 0.0
    %266 = vmatpush2.msra.mxu0 0.0
    %267 = vmatprep.subr.mxu0 0.0
    %268 = vmatpush2.msra.mxu0 0.0
    %269 = vmatprep.subr.mxu0 0.0
    %270 = vmatpush2.msra.mxu0 0.0
    %271 = vmatprep.subr.mxu0 0.0
    %272 = vmatpush2.msra.mxu0 0.0
    %273 = vmatprep.subr.mxu0 0.0
    %274 = vmatpush2.msra.mxu0 0.0
    %275 = vmatprep.subr.mxu0 0.0
    %276 = vmatpush2.msra.mxu0 0.0
    %277 = vmatprep.subr.mxu0 0.0
    %278 = vmatpush2.msra.mxu0 0.0
    %279 = vmatprep.subr.mxu0 0.0
    %280 = vmatpush2.msra.mxu0 0.0
    %281 = vmatprep.subr.mxu0 0.0
    %282 = vmatpush2.msra.mxu0 0.0
    %283 = vmatprep.subr.mxu0 0.0
    %284 = vmatpush2.msra.mxu0 0.0
    %285 = vmatprep.subr.mxu0 0.0
    %286 = vmatpush2.msra.mxu0 0.0
    %287 = vmatprep.subr.mxu0 0.0
    %288 = vmatpush2.msra.mxu0 0.0
    %289 = vmatprep.subr.mxu0 0.0
    %290 = vmatpush2.msra.mxu0 0.0
    %291 = vmatprep.subr.mxu0 0.0
    %292 = vmatpush2.msra.mxu0 0.0
    %293 = vmatprep.mubr.f32.mxu0 0.0
    %294 = vmatmul.mubr.f32.gmra.mxu0 %v227
    %v295 = vpop.f32.mrf.mxu0
    %v296 = vadd.f32 %v224, %v295
    %v297 = vpop.f32.mrf.mxu0
    %298 = vdwg.mxu0
    %v299 = vmax.f32 %v296, 0.0
    %v300 = vld [vmem:[%s5] sm:$0xff]
    %v301 = vld [vmem:[%s5 + $0x8] sm:$0xff]
    %v302 = vld [vmem:[%s5 + $0x10] sm:$0xff]
    %v303 = vld [vmem:[%s5 + $0x18] sm:$0xff]
    %v304 = vld [vmem:[%s6] sm:$0x1]
    %v306 = vlaneseq
    %v307 = vshrl.u32 %v306, 7
    %v308 = vsub.s32 0, %v307
    %v309 = vrot.slane %v304, %v308
    %v312 = vsel %vm137, %v299, 0
    %314 = vmatprep.subr.mxu0 0.0
    %315 = vmatpush1.msra.mxu0 0.0
    %316 = vmatprep.subr.mxu0 0.0
    %317 = vmatpush1.msra.mxu0 0.0
    %318 = vmatprep.subr.mxu0 0.0
    %319 = vmatpush1.msra.mxu0 0.0
    %320 = vmatprep.subr.mxu0 0.0
    %321 = vmatpush1.msra.mxu0 0.0
    %322 = vmatprep.subr.mxu0 0.0
    %323 = vmatpush1.msra.mxu0 0.0
    %324 = vmatprep.subr.mxu0 0.0
    %325 = vmatpush1.msra.mxu0 0.0
    %326 = vmatprep.subr.mxu0 0.0
    %327 = vmatpush1.msra.mxu0 0.0
    %328 = vmatprep.subr.mxu0 0.0
    %329 = vmatpush1.msra.mxu0 0.0
    %330 = vmatprep.subr.mxu0 0.0
    %331 = vmatpush1.msra.mxu0 0.0
    %332 = vmatprep.subr.mxu0 0.0
    %333 = vmatpush1.msra.mxu0 0.0
    %334 = vmatprep.subr.mxu0 0.0
    %335 = vmatpush1.msra.mxu0 0.0
    %336 = vmatprep.subr.mxu0 0.0
    %337 = vmatpush1.msra.mxu0 0.0
    %338 = vmatprep.subr.mxu0 0.0
    %339 = vmatpush1.msra.mxu0 %v303
    %340 = vmatprep.subr.mxu0 0.0
    %341 = vmatpush1.msra.mxu0 %v302
    %342 = vmatprep.subr.mxu0 0.0
    %343 = vmatpush1.msra.mxu0 %v301
    %344 = vmatprep.subr.mxu0 0.0
    %345 = vmatpush1.msra.mxu0 %v300
    %346 = vmatprep.subr.mxu0 0.0
    %347 = vmatpush2.msra.mxu0 0.0
    %348 = vmatprep.subr.mxu0 0.0
    %349 = vmatpush2.msra.mxu0 0.0
    %350 = vmatprep.subr.mxu0 0.0
    %351 = vmatpush2.msra.mxu0 0.0
    %352 = vmatprep.subr.mxu0 0.0
    %353 = vmatpush2.msra.mxu0 0.0
    %354 = vmatprep.subr.mxu0 0.0
    %355 = vmatpush2.msra.mxu0 0.0
    %356 = vmatprep.subr.mxu0 0.0
    %357 = vmatpush2.msra.mxu0 0.0
    %358 = vmatprep.subr.mxu0 0.0
    %359 = vmatpush2.msra.mxu0 0.0
    %360 = vmatprep.subr.mxu0 0.0
    %361 = vmatpush2.msra.mxu0 0.0
    %362 = vmatprep.subr.mxu0 0.0
    %363 = vmatpush2.msra.mxu0 0.0
    %364 = vmatprep.subr.mxu0 0.0
    %365 = vmatpush2.msra.mxu0 0.0
    %366 = vmatprep.subr.mxu0 0.0
    %367 = vmatpush2.msra.mxu0 0.0
    %368 = vmatprep.subr.mxu0 0.0
    %369 = vmatpush2.msra.mxu0 0.0
    %370 = vmatprep.subr.mxu0 0.0
    %371 = vmatpush2.msra.mxu0 0.0
    %372 = vmatprep.subr.mxu0 0.0
    %373 = vmatpush2.msra.mxu0 0.0
    %374 = vmatprep.subr.mxu0 0.0
    %375 = vmatpush2.msra.mxu0 0.0
    %376 = vmatprep.subr.mxu0 0.0
    %377 = vmatpush2.msra.mxu0 0.0
    %378 = vmatprep.mubr.f32.mxu0 0.0
    %379 = vmatmul.mubr.f32.gmra.mxu0 %v312
    %v380 = vpop.f32.mrf.mxu0
    %v381 = vadd.f32 %v309, %v380
    %v382 = vpop.f32.mrf.mxu0
    %383 = vdwg.mxu0
    %vm384 = vcmask 64512
    %385 = vst.msk [vmem:[#allocation5] sm:$0xff] %vm384, %v381
    %s386 = scalar_lea.vmem %s0, 8
    %v387 = vld [vmem:[%s386] sm:$0xff]
    %s388 = scalar_lea.vmem %s1, 16
    %v389 = vld [vmem:[%s388] sm:$0xff]
    %v390 = vld [vmem:[%s388 + $0x8] sm:$0xff]
    %s391 = scalar_lea.vmem %s2, 1
    %v392 = vld [vmem:[%s391] sm:$0x1]
    %v394 = vlaneseq
    %v395 = vshrl.u32 %v394, 7
    %v396 = vsub.s32 0, %v395
    %v397 = vrot.slane %v392, %v396
    %v400 = vsel %vm51, %v387, 0
    %402 = vmatprep.subr.mxu0 0.0
    %403 = vmatpush1.msra.mxu0 0.0
    %404 = vmatprep.subr.mxu0 0.0
    %405 = vmatpush1.msra.mxu0 0.0
    %406 = vmatprep.subr.mxu0 0.0
    %407 = vmatpush1.msra.mxu0 0.0
    %408 = vmatprep.subr.mxu0 0.0
    %409 = vmatpush1.msra.mxu0 0.0
    %410 = vmatprep.subr.mxu0 0.0
    %411 = vmatpush1.msra.mxu0 0.0
    %412 = vmatprep.subr.mxu0 0.0
    %413 = vmatpush1.msra.mxu0 0.0
    %414 = vmatprep.subr.mxu0 0.0
    %415 = vmatpush1.msra.mxu0 0.0
    %416 = vmatprep.subr.mxu0 0.0
    %417 = vmatpush1.msra.mxu0 0.0
    %418 = vmatprep.subr.mxu0 0.0
    %419 = vmatpush1.msra.mxu0 0.0
    %420 = vmatprep.subr.mxu0 0.0
    %421 = vmatpush1.msra.mxu0 0.0
    %422 = vmatprep.subr.mxu0 0.0
    %423 = vmatpush1.msra.mxu0 0.0
    %424 = vmatprep.subr.mxu0 0.0
    %425 = vmatpush1.msra.mxu0 0.0
    %426 = vmatprep.subr.mxu0 0.0
    %427 = vmatpush1.msra.mxu0 0.0
    %428 = vmatprep.subr.mxu0 0.0
    %429 = vmatpush1.msra.mxu0 0.0
    %430 = vmatprep.subr.mxu0 0.0
    %431 = vmatpush1.msra.mxu0 %v390
    %432 = vmatprep.subr.mxu0 0.0
    %433 = vmatpush1.msra.mxu0 %v389
    %434 = vmatprep.subr.mxu0 0.0
    %435 = vmatpush2.msra.mxu0 0.0
    %436 = vmatprep.subr.mxu0 0.0
    %437 = vmatpush2.msra.mxu0 0.0
    %438 = vmatprep.subr.mxu0 0.0
    %439 = vmatpush2.msra.mxu0 0.0
    %440 = vmatprep.subr.mxu0 0.0
    %441 = vmatpush2.msra.mxu0 0.0
    %442 = vmatprep.subr.mxu0 0.0
    %443 = vmatpush2.msra.mxu0 0.0
    %444 = vmatprep.subr.mxu0 0.0
    %445 = vmatpush2.msra.mxu0 0.0
    %446 = vmatprep.subr.mxu0 0.0
    %447 = vmatpush2.msra.mxu0 0.0
    %448 = vmatprep.subr.mxu0 0.0
    %449 = vmatpush2.msra.mxu0 0.0
    %450 = vmatprep.subr.mxu0 0.0
    %451 = vmatpush2.msra.mxu0 0.0
    %452 = vmatprep.subr.mxu0 0.0
    %453 = vmatpush2.msra.mxu0 0.0
    %454 = vmatprep.subr.mxu0 0.0
    %455 = vmatpush2.msra.mxu0 0.0
    %456 = vmatprep.subr.mxu0 0.0
    %457 = vmatpush2.msra.mxu0 0.0
    %458 = vmatprep.subr.mxu0 0.0
    %459 = vmatpush2.msra.mxu0 0.0
    %460 = vmatprep.subr.mxu0 0.0
    %461 = vmatpush2.msra.mxu0 0.0
    %462 = vmatprep.subr.mxu0 0.0
    %463 = vmatpush2.msra.mxu0 0.0
    %464 = vmatprep.subr.mxu0 0.0
    %465 = vmatpush2.msra.mxu0 0.0
    %466 = vmatprep.mubr.f32.mxu0 0.0
    %467 = vmatmul.mubr.f32.gmra.mxu0 %v400
    %v468 = vpop.f32.mrf.mxu0
    %v469 = vadd.f32 %v397, %v468
    %v470 = vpop.f32.mrf.mxu0
    %471 = vdwg.mxu0
    %v472 = vmax.f32 %v469, 0.0
    %s473 = scalar_lea.vmem [#allocation2], 32
    %v474 = vld [vmem:[%s473] sm:$0xff]
    %v475 = vld [vmem:[%s473 + $0x8] sm:$0xff]
    %v476 = vld [vmem:[%s473 + $0x10] sm:$0xff]
    %v477 = vld [vmem:[%s473 + $0x18] sm:$0xff]
    %s478 = scalar_lea.vmem %s4, 1
    %v479 = vld [vmem:[%s478] sm:$0x1]
    %v481 = vlaneseq
    %v482 = vshrl.u32 %v481, 7
    %v483 = vsub.s32 0, %v482
    %v484 = vrot.slane %v479, %v483
    %v487 = vsel %vm137, %v472, 0
    %489 = vmatprep.subr.mxu0 0.0
    %490 = vmatpush1.msra.mxu0 0.0
    %491 = vmatprep.subr.mxu0 0.0
    %492 = vmatpush1.msra.mxu0 0.0
    %493 = vmatprep.subr.mxu0 0.0
    %494 = vmatpush1.msra.mxu0 0.0
    %495 = vmatprep.subr.mxu0 0.0
    %496 = vmatpush1.msra.mxu0 0.0
    %497 = vmatprep.subr.mxu0 0.0
    %498 = vmatpush1.msra.mxu0 0.0
    %499 = vmatprep.subr.mxu0 0.0
    %500 = vmatpush1.msra.mxu0 0.0
    %501 = vmatprep.subr.mxu0 0.0
    %502 = vmatpush1.msra.mxu0 0.0
    %503 = vmatprep.subr.mxu0 0.0
    %504 = vmatpush1.msra.mxu0 0.0
    %505 = vmatprep.subr.mxu0 0.0
    %506 = vmatpush1.msra.mxu0 0.0
    %507 = vmatprep.subr.mxu0 0.0
    %508 = vmatpush1.msra.mxu0 0.0
    %509 = vmatprep.subr.mxu0 0.0
    %510 = vmatpush1.msra.mxu0 0.0
    %511 = vmatprep.subr.mxu0 0.0
    %512 = vmatpush1.msra.mxu0 0.0
    %513 = vmatprep.subr.mxu0 0.0
    %514 = vmatpush1.msra.mxu0 %v477
    %515 = vmatprep.subr.mxu0 0.0
    %516 = vmatpush1.msra.mxu0 %v476
    %517 = vmatprep.subr.mxu0 0.0
    %518 = vmatpush1.msra.mxu0 %v475
    %519 = vmatprep.subr.mxu0 0.0
    %520 = vmatpush1.msra.mxu0 %v474
    %521 = vmatprep.subr.mxu0 0.0
    %522 = vmatpush2.msra.mxu0 0.0
    %523 = vmatprep.subr.mxu0 0.0
    %524 = vmatpush2.msra.mxu0 0.0
    %525 = vmatprep.subr.mxu0 0.0
    %526 = vmatpush2.msra.mxu0 0.0
    %527 = vmatprep.subr.mxu0 0.0
    %528 = vmatpush2.msra.mxu0 0.0
    %529 = vmatprep.subr.mxu0 0.0
    %530 = vmatpush2.msra.mxu0 0.0
    %531 = vmatprep.subr.mxu0 0.0
    %532 = vmatpush2.msra.mxu0 0.0
    %533 = vmatprep.subr.mxu0 0.0
    %534 = vmatpush2.msra.mxu0 0.0
    %535 = vmatprep.subr.mxu0 0.0
    %536 = vmatpush2.msra.mxu0 0.0
    %537 = vmatprep.subr.mxu0 0.0
    %538 = vmatpush2.msra.mxu0 0.0
    %539 = vmatprep.subr.mxu0 0.0
    %540 = vmatpush2.msra.mxu0 0.0
    %541 = vmatprep.subr.mxu0 0.0
    %542 = vmatpush2.msra.mxu0 0.0
    %543 = vmatprep.subr.mxu0 0.0
    %544 = vmatpush2.msra.mxu0 0.0
    %545 = vmatprep.subr.mxu0 0.0
    %546 = vmatpush2.msra.mxu0 0.0
    %547 = vmatprep.subr.mxu0 0.0
    %548 = vmatpush2.msra.mxu0 0.0
    %549 = vmatprep.subr.mxu0 0.0
    %550 = vmatpush2.msra.mxu0 0.0
    %551 = vmatprep.subr.mxu0 0.0
    %552 = vmatpush2.msra.mxu0 0.0
    %553 = vmatprep.mubr.f32.mxu0 0.0
    %554 = vmatmul.mubr.f32.gmra.mxu0 %v487
    %v555 = vpop.f32.mrf.mxu0
    %v556 = vadd.f32 %v484, %v555
    %v557 = vpop.f32.mrf.mxu0
    %558 = vdwg.mxu0
    %v559 = vadd.f32 %v472, %v556
    %v560 = vmax.f32 %v559, 0.0
    %s561 = scalar_lea.vmem [#allocation2], 160
    %v562 = vld [vmem:[%s561] sm:$0xff]
    %v563 = vld [vmem:[%s561 + $0x8] sm:$0xff]
    %v564 = vld [vmem:[%s561 + $0x10] sm:$0xff]
    %v565 = vld [vmem:[%s561 + $0x18] sm:$0xff]
    %s566 = scalar_lea.vmem %s4, 5
    %v567 = vld [vmem:[%s566] sm:$0x1]
    %v569 = vlaneseq
    %v570 = vshrl.u32 %v569, 7
    %v571 = vsub.s32 0, %v570
    %v572 = vrot.slane %v567, %v571
    %v575 = vsel %vm137, %v560, 0
    %577 = vmatprep.subr.mxu0 0.0
    %578 = vmatpush1.msra.mxu0 0.0
    %579 = vmatprep.subr.mxu0 0.0
    %580 = vmatpush1.msra.mxu0 0.0
    %581 = vmatprep.subr.mxu0 0.0
    %582 = vmatpush1.msra.mxu0 0.0
    %583 = vmatprep.subr.mxu0 0.0
    %584 = vmatpush1.msra.mxu0 0.0
    %585 = vmatprep.subr.mxu0 0.0
    %586 = vmatpush1.msra.mxu0 0.0
    %587 = vmatprep.subr.mxu0 0.0
    %588 = vmatpush1.msra.mxu0 0.0
    %589 = vmatprep.subr.mxu0 0.0
    %590 = vmatpush1.msra.mxu0 0.0
    %591 = vmatprep.subr.mxu0 0.0
    %592 = vmatpush1.msra.mxu0 0.0
    %593 = vmatprep.subr.mxu0 0.0
    %594 = vmatpush1.msra.mxu0 0.0
    %595 = vmatprep.subr.mxu0 0.0
    %596 = vmatpush1.msra.mxu0 0.0
    %597 = vmatprep.subr.mxu0 0.0
    %598 = vmatpush1.msra.mxu0 0.0
    %599 = vmatprep.subr.mxu0 0.0
    %600 = vmatpush1.msra.mxu0 0.0
    %601 = vmatprep.subr.mxu0 0.0
    %602 = vmatpush1.msra.mxu0 %v565
    %603 = vmatprep.subr.mxu0 0.0
    %604 = vmatpush1.msra.mxu0 %v564
    %605 = vmatprep.subr.mxu0 0.0
    %606 = vmatpush1.msra.mxu0 %v563
    %607 = vmatprep.subr.mxu0 0.0
    %608 = vmatpush1.msra.mxu0 %v562
    %609 = vmatprep.subr.mxu0 0.0
    %610 = vmatpush2.msra.mxu0 0.0
    %611 = vmatprep.subr.mxu0 0.0
    %612 = vmatpush2.msra.mxu0 0.0
    %613 = vmatprep.subr.mxu0 0.0
    %614 = vmatpush2.msra.mxu0 0.0
    %615 = vmatprep.subr.mxu0 0.0
    %616 = vmatpush2.msra.mxu0 0.0
    %617 = vmatprep.subr.mxu0 0.0
    %618 = vmatpush2.msra.mxu0 0.0
    %619 = vmatprep.subr.mxu0 0.0
    %620 = vmatpush2.msra.mxu0 0.0
    %621 = vmatprep.subr.mxu0 0.0
    %622 = vmatpush2.msra.mxu0 0.0
    %623 = vmatprep.subr.mxu0 0.0
    %624 = vmatpush2.msra.mxu0 0.0
    %625 = vmatprep.subr.mxu0 0.0
    %626 = vmatpush2.msra.mxu0 0.0
    %627 = vmatprep.subr.mxu0 0.0
    %628 = vmatpush2.msra.mxu0 0.0
    %629 = vmatprep.subr.mxu0 0.0
    %630 = vmatpush2.msra.mxu0 0.0
    %631 = vmatprep.subr.mxu0 0.0
    %632 = vmatpush2.msra.mxu0 0.0
    %633 = vmatprep.subr.mxu0 0.0
    %634 = vmatpush2.msra.mxu0 0.0
    %635 = vmatprep.subr.mxu0 0.0
    %636 = vmatpush2.msra.mxu0 0.0
    %637 = vmatprep.subr.mxu0 0.0
    %638 = vmatpush2.msra.mxu0 0.0
    %639 = vmatprep.subr.mxu0 0.0
    %640 = vmatpush2.msra.mxu0 0.0
    %641 = vmatprep.mubr.f32.mxu0 0.0
    %642 = vmatmul.mubr.f32.gmra.mxu0 %v575
    %v643 = vpop.f32.mrf.mxu0
    %v644 = vadd.f32 %v572, %v643
    %v645 = vpop.f32.mrf.mxu0
    %646 = vdwg.mxu0
    %v647 = vmax.f32 %v644, 0.0
    %s648 = scalar_lea.vmem %s5, 32
    %v649 = vld [vmem:[%s648] sm:$0xff]
    %v650 = vld [vmem:[%s648 + $0x8] sm:$0xff]
    %v651 = vld [vmem:[%s648 + $0x10] sm:$0xff]
    %v652 = vld [vmem:[%s648 + $0x18] sm:$0xff]
    %s653 = scalar_lea.vmem %s6, 1
    %v654 = vld [vmem:[%s653] sm:$0x1]
    %v656 = vlaneseq
    %v657 = vshrl.u32 %v656, 7
    %v658 = vsub.s32 0, %v657
    %v659 = vrot.slane %v654, %v658
    %v662 = vsel %vm137, %v647, 0
    %664 = vmatprep.subr.mxu0 0.0
    %665 = vmatpush1.msra.mxu0 0.0
    %666 = vmatprep.subr.mxu0 0.0
    %667 = vmatpush1.msra.mxu0 0.0
    %668 = vmatprep.subr.mxu0 0.0
    %669 = vmatpush1.msra.mxu0 0.0
    %670 = vmatprep.subr.mxu0 0.0
    %671 = vmatpush1.msra.mxu0 0.0
    %672 = vmatprep.subr.mxu0 0.0
    %673 = vmatpush1.msra.mxu0 0.0
    %674 = vmatprep.subr.mxu0 0.0
    %675 = vmatpush1.msra.mxu0 0.0
    %676 = vmatprep.subr.mxu0 0.0
    %677 = vmatpush1.msra.mxu0 0.0
    %678 = vmatprep.subr.mxu0 0.0
    %679 = vmatpush1.msra.mxu0 0.0
    %680 = vmatprep.subr.mxu0 0.0
    %681 = vmatpush1.msra.mxu0 0.0
    %682 = vmatprep.subr.mxu0 0.0
    %683 = vmatpush1.msra.mxu0 0.0
    %684 = vmatprep.subr.mxu0 0.0
    %685 = vmatpush1.msra.mxu0 0.0
    %686 = vmatprep.subr.mxu0 0.0
    %687 = vmatpush1.msra.mxu0 0.0
    %688 = vmatprep.subr.mxu0 0.0
    %689 = vmatpush1.msra.mxu0 %v652
    %690 = vmatprep.subr.mxu0 0.0
    %691 = vmatpush1.msra.mxu0 %v651
    %692 = vmatprep.subr.mxu0 0.0
    %693 = vmatpush1.msra.mxu0 %v650
    %694 = vmatprep.subr.mxu0 0.0
    %695 = vmatpush1.msra.mxu0 %v649
    %696 = vmatprep.subr.mxu0 0.0
    %697 = vmatpush2.msra.mxu0 0.0
    %698 = vmatprep.subr.mxu0 0.0
    %699 = vmatpush2.msra.mxu0 0.0
    %700 = vmatprep.subr.mxu0 0.0
    %701 = vmatpush2.msra.mxu0 0.0
    %702 = vmatprep.subr.mxu0 0.0
    %703 = vmatpush2.msra.mxu0 0.0
    %704 = vmatprep.subr.mxu0 0.0
    %705 = vmatpush2.msra.mxu0 0.0
    %706 = vmatprep.subr.mxu0 0.0
    %707 = vmatpush2.msra.mxu0 0.0
    %708 = vmatprep.subr.mxu0 0.0
    %709 = vmatpush2.msra.mxu0 0.0
    %710 = vmatprep.subr.mxu0 0.0
    %711 = vmatpush2.msra.mxu0 0.0
    %712 = vmatprep.subr.mxu0 0.0
    %713 = vmatpush2.msra.mxu0 0.0
    %714 = vmatprep.subr.mxu0 0.0
    %715 = vmatpush2.msra.mxu0 0.0
    %716 = vmatprep.subr.mxu0 0.0
    %717 = vmatpush2.msra.mxu0 0.0
    %718 = vmatprep.subr.mxu0 0.0
    %719 = vmatpush2.msra.mxu0 0.0
    %720 = vmatprep.subr.mxu0 0.0
    %721 = vmatpush2.msra.mxu0 0.0
    %722 = vmatprep.subr.mxu0 0.0
    %723 = vmatpush2.msra.mxu0 0.0
    %724 = vmatprep.subr.mxu0 0.0
    %725 = vmatpush2.msra.mxu0 0.0
    %726 = vmatprep.subr.mxu0 0.0
    %727 = vmatpush2.msra.mxu0 0.0
    %728 = vmatprep.mubr.f32.mxu0 0.0
    %729 = vmatmul.mubr.f32.gmra.mxu0 %v662
    %v730 = vpop.f32.mrf.mxu0
    %v731 = vadd.f32 %v659, %v730
    %v732 = vpop.f32.mrf.mxu0
    %733 = vdwg.mxu0
    %s734 = scalar_lea.vmem [#allocation5], 8
    %735 = vst.msk [vmem:[%s734] sm:$0xff] %vm384, %v731
    %s736 = scalar_lea.vmem %s0, 16
    %v737 = vld [vmem:[%s736] sm:$0xff]
    %s738 = scalar_lea.vmem %s1, 32
    %v739 = vld [vmem:[%s738] sm:$0xff]
    %v740 = vld [vmem:[%s738 + $0x8] sm:$0xff]
    %s741 = scalar_lea.vmem %s2, 2
    %v742 = vld [vmem:[%s741] sm:$0x1]
    %v744 = vlaneseq
    %v745 = vshrl.u32 %v744, 7
    %v746 = vsub.s32 0, %v745
    %v747 = vrot.slane %v742, %v746
    %v750 = vsel %vm51, %v737, 0
    %752 = vmatprep.subr.mxu0 0.0
    %753 = vmatpush1.msra.mxu0 0.0
    %754 = vmatprep.subr.mxu0 0.0
    %755 = vmatpush1.msra.mxu0 0.0
    %756 = vmatprep.subr.mxu0 0.0
    %757 = vmatpush1.msra.mxu0 0.0
    %758 = vmatprep.subr.mxu0 0.0
    %759 = vmatpush1.msra.mxu0 0.0
    %760 = vmatprep.subr.mxu0 0.0
    %761 = vmatpush1.msra.mxu0 0.0
    %762 = vmatprep.subr.mxu0 0.0
    %763 = vmatpush1.msra.mxu0 0.0
    %764 = vmatprep.subr.mxu0 0.0
    %765 = vmatpush1.msra.mxu0 0.0
    %766 = vmatprep.subr.mxu0 0.0
    %767 = vmatpush1.msra.mxu0 0.0
    %768 = vmatprep.subr.mxu0 0.0
    %769 = vmatpush1.msra.mxu0 0.0
    %770 = vmatprep.subr.mxu0 0.0
    %771 = vmatpush1.msra.mxu0 0.0
    %772 = vmatprep.subr.mxu0 0.0
    %773 = vmatpush1.msra.mxu0 0.0
    %774 = vmatprep.subr.mxu0 0.0
    %775 = vmatpush1.msra.mxu0 0.0
    %776 = vmatprep.subr.mxu0 0.0
    %777 = vmatpush1.msra.mxu0 0.0
    %778 = vmatprep.subr.mxu0 0.0
    %779 = vmatpush1.msra.mxu0 0.0
    %780 = vmatprep.subr.mxu0 0.0
    %781 = vmatpush1.msra.mxu0 %v740
    %782 = vmatprep.subr.mxu0 0.0
    %783 = vmatpush1.msra.mxu0 %v739
    %784 = vmatprep.subr.mxu0 0.0
    %785 = vmatpush2.msra.mxu0 0.0
    %786 = vmatprep.subr.mxu0 0.0
    %787 = vmatpush2.msra.mxu0 0.0
    %788 = vmatprep.subr.mxu0 0.0
    %789 = vmatpush2.msra.mxu0 0.0
    %790 = vmatprep.subr.mxu0 0.0
    %791 = vmatpush2.msra.mxu0 0.0
    %792 = vmatprep.subr.mxu0 0.0
    %793 = vmatpush2.msra.mxu0 0.0
    %794 = vmatprep.subr.mxu0 0.0
    %795 = vmatpush2.msra.mxu0 0.0
    %796 = vmatprep.subr.mxu0 0.0
    %797 = vmatpush2.msra.mxu0 0.0
    %798 = vmatprep.subr.mxu0 0.0
    %799 = vmatpush2.msra.mxu0 0.0
    %800 = vmatprep.subr.mxu0 0.0
    %801 = vmatpush2.msra.mxu0 0.0
    %802 = vmatprep.subr.mxu0 0.0
    %803 = vmatpush2.msra.mxu0 0.0
    %804 = vmatprep.subr.mxu0 0.0
    %805 = vmatpush2.msra.mxu0 0.0
    %806 = vmatprep.subr.mxu0 0.0
    %807 = vmatpush2.msra.mxu0 0.0
    %808 = vmatprep.subr.mxu0 0.0
    %809 = vmatpush2.msra.mxu0 0.0
    %810 = vmatprep.subr.mxu0 0.0
    %811 = vmatpush2.msra.mxu0 0.0
    %812 = vmatprep.subr.mxu0 0.0
    %813 = vmatpush2.msra.mxu0 0.0
    %814 = vmatprep.subr.mxu0 0.0
    %815 = vmatpush2.msra.mxu0 0.0
    %816 = vmatprep.mubr.f32.mxu0 0.0
    %817 = vmatmul.mubr.f32.gmra.mxu0 %v750
    %v818 = vpop.f32.mrf.mxu0
    %v819 = vadd.f32 %v747, %v818
    %v820 = vpop.f32.mrf.mxu0
    %821 = vdwg.mxu0
    %v822 = vmax.f32 %v819, 0.0
    %s823 = scalar_lea.vmem [#allocation2], 64
    %v824 = vld [vmem:[%s823] sm:$0xff]
    %v825 = vld [vmem:[%s823 + $0x8] sm:$0xff]
    %v826 = vld [vmem:[%s823 + $0x10] sm:$0xff]
    %v827 = vld [vmem:[%s823 + $0x18] sm:$0xff]
    %s828 = scalar_lea.vmem %s4, 2
    %v829 = vld [vmem:[%s828] sm:$0x1]
    %v831 = vlaneseq
    %v832 = vshrl.u32 %v831, 7
    %v833 = vsub.s32 0, %v832
    %v834 = vrot.slane %v829, %v833
    %v837 = vsel %vm137, %v822, 0
    %839 = vmatprep.subr.mxu0 0.0
    %840 = vmatpush1.msra.mxu0 0.0
    %841 = vmatprep.subr.mxu0 0.0
    %842 = vmatpush1.msra.mxu0 0.0
    %843 = vmatprep.subr.mxu0 0.0
    %844 = vmatpush1.msra.mxu0 0.0
    %845 = vmatprep.subr.mxu0 0.0
    %846 = vmatpush1.msra.mxu0 0.0
    %847 = vmatprep.subr.mxu0 0.0
    %848 = vmatpush1.msra.mxu0 0.0
    %849 = vmatprep.subr.mxu0 0.0
    %850 = vmatpush1.msra.mxu0 0.0
    %851 = vmatprep.subr.mxu0 0.0
    %852 = vmatpush1.msra.mxu0 0.0
    %853 = vmatprep.subr.mxu0 0.0
    %854 = vmatpush1.msra.mxu0 0.0
    %855 = vmatprep.subr.mxu0 0.0
    %856 = vmatpush1.msra.mxu0 0.0
    %857 = vmatprep.subr.mxu0 0.0
    %858 = vmatpush1.msra.mxu0 0.0
    %859 = vmatprep.subr.mxu0 0.0
    %860 = vmatpush1.msra.mxu0 0.0
    %861 = vmatprep.subr.mxu0 0.0
    %862 = vmatpush1.msra.mxu0 0.0
    %863 = vmatprep.subr.mxu0 0.0
    %864 = vmatpush1.msra.mxu0 %v827
    %865 = vmatprep.subr.mxu0 0.0
    %866 = vmatpush1.msra.mxu0 %v826
    %867 = vmatprep.subr.mxu0 0.0
    %868 = vmatpush1.msra.mxu0 %v825
    %869 = vmatprep.subr.mxu0 0.0
    %870 = vmatpush1.msra.mxu0 %v824
    %871 = vmatprep.subr.mxu0 0.0
    %872 = vmatpush2.msra.mxu0 0.0
    %873 = vmatprep.subr.mxu0 0.0
    %874 = vmatpush2.msra.mxu0 0.0
    %875 = vmatprep.subr.mxu0 0.0
    %876 = vmatpush2.msra.mxu0 0.0
    %877 = vmatprep.subr.mxu0 0.0
    %878 = vmatpush2.msra.mxu0 0.0
    %879 = vmatprep.subr.mxu0 0.0
    %880 = vmatpush2.msra.mxu0 0.0
    %881 = vmatprep.subr.mxu0 0.0
    %882 = vmatpush2.msra.mxu0 0.0
    %883 = vmatprep.subr.mxu0 0.0
    %884 = vmatpush2.msra.mxu0 0.0
    %885 = vmatprep.subr.mxu0 0.0
    %886 = vmatpush2.msra.mxu0 0.0
    %887 = vmatprep.subr.mxu0 0.0
    %888 = vmatpush2.msra.mxu0 0.0
    %889 = vmatprep.subr.mxu0 0.0
    %890 = vmatpush2.msra.mxu0 0.0
    %891 = vmatprep.subr.mxu0 0.0
    %892 = vmatpush2.msra.mxu0 0.0
    %893 = vmatprep.subr.mxu0 0.0
    %894 = vmatpush2.msra.mxu0 0.0
    %895 = vmatprep.subr.mxu0 0.0
    %896 = vmatpush2.msra.mxu0 0.0
    %897 = vmatprep.subr.mxu0 0.0
    %898 = vmatpush2.msra.mxu0 0.0
    %899 = vmatprep.subr.mxu0 0.0
    %900 = vmatpush2.msra.mxu0 0.0
    %901 = vmatprep.subr.mxu0 0.0
    %902 = vmatpush2.msra.mxu0 0.0
    %903 = vmatprep.mubr.f32.mxu0 0.0
    %904 = vmatmul.mubr.f32.gmra.mxu0 %v837
    %v905 = vpop.f32.mrf.mxu0
    %v906 = vadd.f32 %v834, %v905
    %v907 = vpop.f32.mrf.mxu0
    %908 = vdwg.mxu0
    %v909 = vadd.f32 %v822, %v906
    %v910 = vmax.f32 %v909, 0.0
    %s911 = scalar_lea.vmem [#allocation2], 192
    %v912 = vld [vmem:[%s911] sm:$0xff]
    %v913 = vld [vmem:[%s911 + $0x8] sm:$0xff]
    %v914 = vld [vmem:[%s911 + $0x10] sm:$0xff]
    %v915 = vld [vmem:[%s911 + $0x18] sm:$0xff]
    %s916 = scalar_lea.vmem %s4, 6
    %v917 = vld [vmem:[%s916] sm:$0x1]
    %v919 = vlaneseq
    %v920 = vshrl.u32 %v919, 7
    %v921 = vsub.s32 0, %v920
    %v922 = vrot.slane %v917, %v921
    %v925 = vsel %vm137, %v910, 0
    %927 = vmatprep.subr.mxu0 0.0
    %928 = vmatpush1.msra.mxu0 0.0
    %929 = vmatprep.subr.mxu0 0.0
    %930 = vmatpush1.msra.mxu0 0.0
    %931 = vmatprep.subr.mxu0 0.0
    %932 = vmatpush1.msra.mxu0 0.0
    %933 = vmatprep.subr.mxu0 0.0
    %934 = vmatpush1.msra.mxu0 0.0
    %935 = vmatprep.subr.mxu0 0.0
    %936 = vmatpush1.msra.mxu0 0.0
    %937 = vmatprep.subr.mxu0 0.0
    %938 = vmatpush1.msra.mxu0 0.0
    %939 = vmatprep.subr.mxu0 0.0
    %940 = vmatpush1.msra.mxu0 0.0
    %941 = vmatprep.subr.mxu0 0.0
    %942 = vmatpush1.msra.mxu0 0.0
    %943 = vmatprep.subr.mxu0 0.0
    %944 = vmatpush1.msra.mxu0 0.0
    %945 = vmatprep.subr.mxu0 0.0
    %946 = vmatpush1.msra.mxu0 0.0
    %947 = vmatprep.subr.mxu0 0.0
    %948 = vmatpush1.msra.mxu0 0.0
    %949 = vmatprep.subr.mxu0 0.0
    %950 = vmatpush1.msra.mxu0 0.0
    %951 = vmatprep.subr.mxu0 0.0
    %952 = vmatpush1.msra.mxu0 %v915
    %953 = vmatprep.subr.mxu0 0.0
    %954 = vmatpush1.msra.mxu0 %v914
    %955 = vmatprep.subr.mxu0 0.0
    %956 = vmatpush1.msra.mxu0 %v913
    %957 = vmatprep.subr.mxu0 0.0
    %958 = vmatpush1.msra.mxu0 %v912
    %959 = vmatprep.subr.mxu0 0.0
    %960 = vmatpush2.msra.mxu0 0.0
    %961 = vmatprep.subr.mxu0 0.0
    %962 = vmatpush2.msra.mxu0 0.0
    %963 = vmatprep.subr.mxu0 0.0
    %964 = vmatpush2.msra.mxu0 0.0
    %965 = vmatprep.subr.mxu0 0.0
    %966 = vmatpush2.msra.mxu0 0.0
    %967 = vmatprep.subr.mxu0 0.0
    %968 = vmatpush2.msra.mxu0 0.0
    %969 = vmatprep.subr.mxu0 0.0
    %970 = vmatpush2.msra.mxu0 0.0
    %971 = vmatprep.subr.mxu0 0.0
    %972 = vmatpush2.msra.mxu0 0.0
    %973 = vmatprep.subr.mxu0 0.0
    %974 = vmatpush2.msra.mxu0 0.0
    %975 = vmatprep.subr.mxu0 0.0
    %976 = vmatpush2.msra.mxu0 0.0
    %977 = vmatprep.subr.mxu0 0.0
    %978 = vmatpush2.msra.mxu0 0.0
    %979 = vmatprep.subr.mxu0 0.0
    %980 = vmatpush2.msra.mxu0 0.0
    %981 = vmatprep.subr.mxu0 0.0
    %982 = vmatpush2.msra.mxu0 0.0
    %983 = vmatprep.subr.mxu0 0.0
    %984 = vmatpush2.msra.mxu0 0.0
    %985 = vmatprep.subr.mxu0 0.0
    %986 = vmatpush2.msra.mxu0 0.0
    %987 = vmatprep.subr.mxu0 0.0
    %988 = vmatpush2.msra.mxu0 0.0
    %989 = vmatprep.subr.mxu0 0.0
    %990 = vmatpush2.msra.mxu0 0.0
    %991 = vmatprep.mubr.f32.mxu0 0.0
    %992 = vmatmul.mubr.f32.gmra.mxu0 %v925
    %v993 = vpop.f32.mrf.mxu0
    %v994 = vadd.f32 %v922, %v993
    %v995 = vpop.f32.mrf.mxu0
    %996 = vdwg.mxu0
    %v997 = vmax.f32 %v994, 0.0
    %s998 = scalar_lea.vmem %s5, 64
    %v999 = vld [vmem:[%s998] sm:$0xff]
    %v1000 = vld [vmem:[%s998 + $0x8] sm:$0xff]
    %v1001 = vld [vmem:[%s998 + $0x10] sm:$0xff]
    %v1002 = vld [vmem:[%s998 + $0x18] sm:$0xff]
    %s1003 = scalar_lea.vmem %s6, 2
    %v1004 = vld [vmem:[%s1003] sm:$0x1]
    %v1006 = vlaneseq
    %v1007 = vshrl.u32 %v1006, 7
    %v1008 = vsub.s32 0, %v1007
    %v1009 = vrot.slane %v1004, %v1008
    %v1012 = vsel %vm137, %v997, 0
    %1014 = vmatprep.subr.mxu0 0.0
    %1015 = vmatpush1.msra.mxu0 0.0
    %1016 = vmatprep.subr.mxu0 0.0
    %1017 = vmatpush1.msra.mxu0 0.0
    %1018 = vmatprep.subr.mxu0 0.0
    %1019 = vmatpush1.msra.mxu0 0.0
    %1020 = vmatprep.subr.mxu0 0.0
    %1021 = vmatpush1.msra.mxu0 0.0
    %1022 = vmatprep.subr.mxu0 0.0
    %1023 = vmatpush1.msra.mxu0 0.0
    %1024 = vmatprep.subr.mxu0 0.0
    %1025 = vmatpush1.msra.mxu0 0.0
    %1026 = vmatprep.subr.mxu0 0.0
    %1027 = vmatpush1.msra.mxu0 0.0
    %1028 = vmatprep.subr.mxu0 0.0
    %1029 = vmatpush1.msra.mxu0 0.0
    %1030 = vmatprep.subr.mxu0 0.0
    %1031 = vmatpush1.msra.mxu0 0.0
    %1032 = vmatprep.subr.mxu0 0.0
    %1033 = vmatpush1.msra.mxu0 0.0
    %1034 = vmatprep.subr.mxu0 0.0
    %1035 = vmatpush1.msra.mxu0 0.0
    %1036 = vmatprep.subr.mxu0 0.0
    %1037 = vmatpush1.msra.mxu0 0.0
    %1038 = vmatprep.subr.mxu0 0.0
    %1039 = vmatpush1.msra.mxu0 %v1002
    %1040 = vmatprep.subr.mxu0 0.0
    %1041 = vmatpush1.msra.mxu0 %v1001
    %1042 = vmatprep.subr.mxu0 0.0
    %1043 = vmatpush1.msra.mxu0 %v1000
    %1044 = vmatprep.subr.mxu0 0.0
    %1045 = vmatpush1.msra.mxu0 %v999
    %1046 = vmatprep.subr.mxu0 0.0
    %1047 = vmatpush2.msra.mxu0 0.0
    %1048 = vmatprep.subr.mxu0 0.0
    %1049 = vmatpush2.msra.mxu0 0.0
    %1050 = vmatprep.subr.mxu0 0.0
    %1051 = vmatpush2.msra.mxu0 0.0
    %1052 = vmatprep.subr.mxu0 0.0
    %1053 = vmatpush2.msra.mxu0 0.0
    %1054 = vmatprep.subr.mxu0 0.0
    %1055 = vmatpush2.msra.mxu0 0.0
    %1056 = vmatprep.subr.mxu0 0.0
    %1057 = vmatpush2.msra.mxu0 0.0
    %1058 = vmatprep.subr.mxu0 0.0
    %1059 = vmatpush2.msra.mxu0 0.0
    %1060 = vmatprep.subr.mxu0 0.0
    %1061 = vmatpush2.msra.mxu0 0.0
    %1062 = vmatprep.subr.mxu0 0.0
    %1063 = vmatpush2.msra.mxu0 0.0
    %1064 = vmatprep.subr.mxu0 0.0
    %1065 = vmatpush2.msra.mxu0 0.0
    %1066 = vmatprep.subr.mxu0 0.0
    %1067 = vmatpush2.msra.mxu0 0.0
    %1068 = vmatprep.subr.mxu0 0.0
    %1069 = vmatpush2.msra.mxu0 0.0
    %1070 = vmatprep.subr.mxu0 0.0
    %1071 = vmatpush2.msra.mxu0 0.0
    %1072 = vmatprep.subr.mxu0 0.0
    %1073 = vmatpush2.msra.mxu0 0.0
    %1074 = vmatprep.subr.mxu0 0.0
    %1075 = vmatpush2.msra.mxu0 0.0
    %1076 = vmatprep.subr.mxu0 0.0
    %1077 = vmatpush2.msra.mxu0 0.0
    %1078 = vmatprep.mubr.f32.mxu0 0.0
    %1079 = vmatmul.mubr.f32.gmra.mxu0 %v1012
    %v1080 = vpop.f32.mrf.mxu0
    %v1081 = vadd.f32 %v1009, %v1080
    %v1082 = vpop.f32.mrf.mxu0
    %1083 = vdwg.mxu0
    %s1084 = scalar_lea.vmem [#allocation5], 16
    %1085 = vst.msk [vmem:[%s1084] sm:$0xff] %vm384, %v1081
    %s1086 = scalar_lea.vmem %s0, 24
    %v1087 = vld [vmem:[%s1086] sm:$0xff]
    %s1088 = scalar_lea.vmem %s1, 48
    %v1089 = vld [vmem:[%s1088] sm:$0xff]
    %v1090 = vld [vmem:[%s1088 + $0x8] sm:$0xff]
    %s1091 = scalar_lea.vmem %s2, 3
    %v1092 = vld [vmem:[%s1091] sm:$0x1]
    %v1094 = vlaneseq
    %v1095 = vshrl.u32 %v1094, 7
    %v1096 = vsub.s32 0, %v1095
    %v1097 = vrot.slane %v1092, %v1096
    %v1100 = vsel %vm51, %v1087, 0
    %1102 = vmatprep.subr.mxu0 0.0
    %1103 = vmatpush1.msra.mxu0 0.0
    %1104 = vmatprep.subr.mxu0 0.0
    %1105 = vmatpush1.msra.mxu0 0.0
    %1106 = vmatprep.subr.mxu0 0.0
    %1107 = vmatpush1.msra.mxu0 0.0
    %1108 = vmatprep.subr.mxu0 0.0
    %1109 = vmatpush1.msra.mxu0 0.0
    %1110 = vmatprep.subr.mxu0 0.0
    %1111 = vmatpush1.msra.mxu0 0.0
    %1112 = vmatprep.subr.mxu0 0.0
    %1113 = vmatpush1.msra.mxu0 0.0
    %1114 = vmatprep.subr.mxu0 0.0
    %1115 = vmatpush1.msra.mxu0 0.0
    %1116 = vmatprep.subr.mxu0 0.0
    %1117 = vmatpush1.msra.mxu0 0.0
    %1118 = vmatprep.subr.mxu0 0.0
    %1119 = vmatpush1.msra.mxu0 0.0
    %1120 = vmatprep.subr.mxu0 0.0
    %1121 = vmatpush1.msra.mxu0 0.0
    %1122 = vmatprep.subr.mxu0 0.0
    %1123 = vmatpush1.msra.mxu0 0.0
    %1124 = vmatprep.subr.mxu0 0.0
    %1125 = vmatpush1.msra.mxu0 0.0
    %1126 = vmatprep.subr.mxu0 0.0
    %1127 = vmatpush1.msra.mxu0 0.0
    %1128 = vmatprep.subr.mxu0 0.0
    %1129 = vmatpush1.msra.mxu0 0.0
    %1130 = vmatprep.subr.mxu0 0.0
    %1131 = vmatpush1.msra.mxu0 %v1090
    %1132 = vmatprep.subr.mxu0 0.0
    %1133 = vmatpush1.msra.mxu0 %v1089
    %1134 = vmatprep.subr.mxu0 0.0
    %1135 = vmatpush2.msra.mxu0 0.0
    %1136 = vmatprep.subr.mxu0 0.0
    %1137 = vmatpush2.msra.mxu0 0.0
    %1138 = vmatprep.subr.mxu0 0.0
    %1139 = vmatpush2.msra.mxu0 0.0
    %1140 = vmatprep.subr.mxu0 0.0
    %1141 = vmatpush2.msra.mxu0 0.0
    %1142 = vmatprep.subr.mxu0 0.0
    %1143 = vmatpush2.msra.mxu0 0.0
    %1144 = vmatprep.subr.mxu0 0.0
    %1145 = vmatpush2.msra.mxu0 0.0
    %1146 = vmatprep.subr.mxu0 0.0
    %1147 = vmatpush2.msra.mxu0 0.0
    %1148 = vmatprep.subr.mxu0 0.0
    %1149 = vmatpush2.msra.mxu0 0.0
    %1150 = vmatprep.subr.mxu0 0.0
    %1151 = vmatpush2.msra.mxu0 0.0
    %1152 = vmatprep.subr.mxu0 0.0
    %1153 = vmatpush2.msra.mxu0 0.0
    %1154 = vmatprep.subr.mxu0 0.0
    %1155 = vmatpush2.msra.mxu0 0.0
    %1156 = vmatprep.subr.mxu0 0.0
    %1157 = vmatpush2.msra.mxu0 0.0
    %1158 = vmatprep.subr.mxu0 0.0
    %1159 = vmatpush2.msra.mxu0 0.0
    %1160 = vmatprep.subr.mxu0 0.0
    %1161 = vmatpush2.msra.mxu0 0.0
    %1162 = vmatprep.subr.mxu0 0.0
    %1163 = vmatpush2.msra.mxu0 0.0
    %1164 = vmatprep.subr.mxu0 0.0
    %1165 = vmatpush2.msra.mxu0 0.0
    %1166 = vmatprep.mubr.f32.mxu0 0.0
    %1167 = vmatmul.mubr.f32.gmra.mxu0 %v1100
    %v1168 = vpop.f32.mrf.mxu0
    %v1169 = vadd.f32 %v1097, %v1168
    %v1170 = vpop.f32.mrf.mxu0
    %1171 = vdwg.mxu0
    %v1172 = vmax.f32 %v1169, 0.0
    %s1173 = scalar_lea.vmem [#allocation2], 96
    %v1174 = vld [vmem:[%s1173] sm:$0xff]
    %v1175 = vld [vmem:[%s1173 + $0x8] sm:$0xff]
    %v1176 = vld [vmem:[%s1173 + $0x10] sm:$0xff]
    %v1177 = vld [vmem:[%s1173 + $0x18] sm:$0xff]
    %s1178 = scalar_lea.vmem %s4, 3
    %v1179 = vld [vmem:[%s1178] sm:$0x1]
    %v1181 = vlaneseq
    %v1182 = vshrl.u32 %v1181, 7
    %v1183 = vsub.s32 0, %v1182
    %v1184 = vrot.slane %v1179, %v1183
    %v1187 = vsel %vm137, %v1172, 0
    %1189 = vmatprep.subr.mxu0 0.0
    %1190 = vmatpush1.msra.mxu0 0.0
    %1191 = vmatprep.subr.mxu0 0.0
    %1192 = vmatpush1.msra.mxu0 0.0
    %1193 = vmatprep.subr.mxu0 0.0
    %1194 = vmatpush1.msra.mxu0 0.0
    %1195 = vmatprep.subr.mxu0 0.0
    %1196 = vmatpush1.msra.mxu0 0.0
    %1197 = vmatprep.subr.mxu0 0.0
    %1198 = vmatpush1.msra.mxu0 0.0
    %1199 = vmatprep.subr.mxu0 0.0
    %1200 = vmatpush1.msra.mxu0 0.0
    %1201 = vmatprep.subr.mxu0 0.0
    %1202 = vmatpush1.msra.mxu0 0.0
    %1203 = vmatprep.subr.mxu0 0.0
    %1204 = vmatpush1.msra.mxu0 0.0
    %1205 = vmatprep.subr.mxu0 0.0
    %1206 = vmatpush1.msra.mxu0 0.0
    %1207 = vmatprep.subr.mxu0 0.0
    %1208 = vmatpush1.msra.mxu0 0.0
    %1209 = vmatprep.subr.mxu0 0.0
    %1210 = vmatpush1.msra.mxu0 0.0
    %1211 = vmatprep.subr.mxu0 0.0
    %1212 = vmatpush1.msra.mxu0 0.0
    %1213 = vmatprep.subr.mxu0 0.0
    %1214 = vmatpush1.msra.mxu0 %v1177
    %1215 = vmatprep.subr.mxu0 0.0
    %1216 = vmatpush1.msra.mxu0 %v1176
    %1217 = vmatprep.subr.mxu0 0.0
    %1218 = vmatpush1.msra.mxu0 %v1175
    %1219 = vmatprep.subr.mxu0 0.0
    %1220 = vmatpush1.msra.mxu0 %v1174
    %1221 = vmatprep.subr.mxu0 0.0
    %1222 = vmatpush2.msra.mxu0 0.0
    %1223 = vmatprep.subr.mxu0 0.0
    %1224 = vmatpush2.msra.mxu0 0.0
    %1225 = vmatprep.subr.mxu0 0.0
    %1226 = vmatpush2.msra.mxu0 0.0
    %1227 = vmatprep.subr.mxu0 0.0
    %1228 = vmatpush2.msra.mxu0 0.0
    %1229 = vmatprep.subr.mxu0 0.0
    %1230 = vmatpush2.msra.mxu0 0.0
    %1231 = vmatprep.subr.mxu0 0.0
    %1232 = vmatpush2.msra.mxu0 0.0
    %1233 = vmatprep.subr.mxu0 0.0
    %1234 = vmatpush2.msra.mxu0 0.0
    %1235 = vmatprep.subr.mxu0 0.0
    %1236 = vmatpush2.msra.mxu0 0.0
    %1237 = vmatprep.subr.mxu0 0.0
    %1238 = vmatpush2.msra.mxu0 0.0
    %1239 = vmatprep.subr.mxu0 0.0
    %1240 = vmatpush2.msra.mxu0 0.0
    %1241 = vmatprep.subr.mxu0 0.0
    %1242 = vmatpush2.msra.mxu0 0.0
    %1243 = vmatprep.subr.mxu0 0.0
    %1244 = vmatpush2.msra.mxu0 0.0
    %1245 = vmatprep.subr.mxu0 0.0
    %1246 = vmatpush2.msra.mxu0 0.0
    %1247 = vmatprep.subr.mxu0 0.0
    %1248 = vmatpush2.msra.mxu0 0.0
    %1249 = vmatprep.subr.mxu0 0.0
    %1250 = vmatpush2.msra.mxu0 0.0
    %1251 = vmatprep.subr.mxu0 0.0
    %1252 = vmatpush2.msra.mxu0 0.0
    %1253 = vmatprep.mubr.f32.mxu0 0.0
    %1254 = vmatmul.mubr.f32.gmra.mxu0 %v1187
    %v1255 = vpop.f32.mrf.mxu0
    %v1256 = vadd.f32 %v1184, %v1255
    %v1257 = vpop.f32.mrf.mxu0
    %1258 = vdwg.mxu0
    %v1259 = vadd.f32 %v1172, %v1256
    %v1260 = vmax.f32 %v1259, 0.0
    %s1261 = scalar_lea.vmem [#allocation2], 224
    %v1262 = vld [vmem:[%s1261] sm:$0xff]
    %v1263 = vld [vmem:[%s1261 + $0x8] sm:$0xff]
    %v1264 = vld [vmem:[%s1261 + $0x10] sm:$0xff]
    %v1265 = vld [vmem:[%s1261 + $0x18] sm:$0xff]
    %s1266 = scalar_lea.vmem %s4, 7
    %v1267 = vld [vmem:[%s1266] sm:$0x1]
    %v1269 = vlaneseq
    %v1270 = vshrl.u32 %v1269, 7
    %v1271 = vsub.s32 0, %v1270
    %v1272 = vrot.slane %v1267, %v1271
    %v1275 = vsel %vm137, %v1260, 0
    %1277 = vmatprep.subr.mxu0 0.0
    %1278 = vmatpush1.msra.mxu0 0.0
    %1279 = vmatprep.subr.mxu0 0.0
    %1280 = vmatpush1.msra.mxu0 0.0
    %1281 = vmatprep.subr.mxu0 0.0
    %1282 = vmatpush1.msra.mxu0 0.0
    %1283 = vmatprep.subr.mxu0 0.0
    %1284 = vmatpush1.msra.mxu0 0.0
    %1285 = vmatprep.subr.mxu0 0.0
    %1286 = vmatpush1.msra.mxu0 0.0
    %1287 = vmatprep.subr.mxu0 0.0
    %1288 = vmatpush1.msra.mxu0 0.0
    %1289 = vmatprep.subr.mxu0 0.0
    %1290 = vmatpush1.msra.mxu0 0.0
    %1291 = vmatprep.subr.mxu0 0.0
    %1292 = vmatpush1.msra.mxu0 0.0
    %1293 = vmatprep.subr.mxu0 0.0
    %1294 = vmatpush1.msra.mxu0 0.0
    %1295 = vmatprep.subr.mxu0 0.0
    %1296 = vmatpush1.msra.mxu0 0.0
    %1297 = vmatprep.subr.mxu0 0.0
    %1298 = vmatpush1.msra.mxu0 0.0
    %1299 = vmatprep.subr.mxu0 0.0
    %1300 = vmatpush1.msra.mxu0 0.0
    %1301 = vmatprep.subr.mxu0 0.0
    %1302 = vmatpush1.msra.mxu0 %v1265
    %1303 = vmatprep.subr.mxu0 0.0
    %1304 = vmatpush1.msra.mxu0 %v1264
    %1305 = vmatprep.subr.mxu0 0.0
    %1306 = vmatpush1.msra.mxu0 %v1263
    %1307 = vmatprep.subr.mxu0 0.0
    %1308 = vmatpush1.msra.mxu0 %v1262
    %1309 = vmatprep.subr.mxu0 0.0
    %1310 = vmatpush2.msra.mxu0 0.0
    %1311 = vmatprep.subr.mxu0 0.0
    %1312 = vmatpush2.msra.mxu0 0.0
    %1313 = vmatprep.subr.mxu0 0.0
    %1314 = vmatpush2.msra.mxu0 0.0
    %1315 = vmatprep.subr.mxu0 0.0
    %1316 = vmatpush2.msra.mxu0 0.0
    %1317 = vmatprep.subr.mxu0 0.0
    %1318 = vmatpush2.msra.mxu0 0.0
    %1319 = vmatprep.subr.mxu0 0.0
    %1320 = vmatpush2.msra.mxu0 0.0
    %1321 = vmatprep.subr.mxu0 0.0
    %1322 = vmatpush2.msra.mxu0 0.0
    %1323 = vmatprep.subr.mxu0 0.0
    %1324 = vmatpush2.msra.mxu0 0.0
    %1325 = vmatprep.subr.mxu0 0.0
    %1326 = vmatpush2.msra.mxu0 0.0
    %1327 = vmatprep.subr.mxu0 0.0
    %1328 = vmatpush2.msra.mxu0 0.0
    %1329 = vmatprep.subr.mxu0 0.0
    %1330 = vmatpush2.msra.mxu0 0.0
    %1331 = vmatprep.subr.mxu0 0.0
    %1332 = vmatpush2.msra.mxu0 0.0
    %1333 = vmatprep.subr.mxu0 0.0
    %1334 = vmatpush2.msra.mxu0 0.0
    %1335 = vmatprep.subr.mxu0 0.0
    %1336 = vmatpush2.msra.mxu0 0.0
    %1337 = vmatprep.subr.mxu0 0.0
    %1338 = vmatpush2.msra.mxu0 0.0
    %1339 = vmatprep.subr.mxu0 0.0
    %1340 = vmatpush2.msra.mxu0 0.0
    %1341 = vmatprep.mubr.f32.mxu0 0.0
    %1342 = vmatmul.mubr.f32.gmra.mxu0 %v1275
    %v1343 = vpop.f32.mrf.mxu0
    %v1344 = vadd.f32 %v1272, %v1343
    %v1345 = vpop.f32.mrf.mxu0
    %1346 = vdwg.mxu0
    %v1347 = vmax.f32 %v1344, 0.0
    %s1348 = scalar_lea.vmem %s5, 96
    %v1349 = vld [vmem:[%s1348] sm:$0xff]
    %v1350 = vld [vmem:[%s1348 + $0x8] sm:$0xff]
    %v1351 = vld [vmem:[%s1348 + $0x10] sm:$0xff]
    %v1352 = vld [vmem:[%s1348 + $0x18] sm:$0xff]
    %s1353 = scalar_lea.vmem %s6, 3
    %v1354 = vld [vmem:[%s1353] sm:$0x1]
    %v1356 = vlaneseq
    %v1357 = vshrl.u32 %v1356, 7
    %v1358 = vsub.s32 0, %v1357
    %v1359 = vrot.slane %v1354, %v1358
    %v1362 = vsel %vm137, %v1347, 0
    %1364 = vmatprep.subr.mxu0 0.0
    %1365 = vmatpush1.msra.mxu0 0.0
    %1366 = vmatprep.subr.mxu0 0.0
    %1367 = vmatpush1.msra.mxu0 0.0
    %1368 = vmatprep.subr.mxu0 0.0
    %1369 = vmatpush1.msra.mxu0 0.0
    %1370 = vmatprep.subr.mxu0 0.0
    %1371 = vmatpush1.msra.mxu0 0.0
    %1372 = vmatprep.subr.mxu0 0.0
    %1373 = vmatpush1.msra.mxu0 0.0
    %1374 = vmatprep.subr.mxu0 0.0
    %1375 = vmatpush1.msra.mxu0 0.0
    %1376 = vmatprep.subr.mxu0 0.0
    %1377 = vmatpush1.msra.mxu0 0.0
    %1378 = vmatprep.subr.mxu0 0.0
    %1379 = vmatpush1.msra.mxu0 0.0
    %1380 = vmatprep.subr.mxu0 0.0
    %1381 = vmatpush1.msra.mxu0 0.0
    %1382 = vmatprep.subr.mxu0 0.0
    %1383 = vmatpush1.msra.mxu0 0.0
    %1384 = vmatprep.subr.mxu0 0.0
    %1385 = vmatpush1.msra.mxu0 0.0
    %1386 = vmatprep.subr.mxu0 0.0
    %1387 = vmatpush1.msra.mxu0 0.0
    %1388 = vmatprep.subr.mxu0 0.0
    %1389 = vmatpush1.msra.mxu0 %v1352
    %1390 = vmatprep.subr.mxu0 0.0
    %1391 = vmatpush1.msra.mxu0 %v1351
    %1392 = vmatprep.subr.mxu0 0.0
    %1393 = vmatpush1.msra.mxu0 %v1350
    %1394 = vmatprep.subr.mxu0 0.0
    %1395 = vmatpush1.msra.mxu0 %v1349
    %1396 = vmatprep.subr.mxu0 0.0
    %1397 = vmatpush2.msra.mxu0 0.0
    %1398 = vmatprep.subr.mxu0 0.0
    %1399 = vmatpush2.msra.mxu0 0.0
    %1400 = vmatprep.subr.mxu0 0.0
    %1401 = vmatpush2.msra.mxu0 0.0
    %1402 = vmatprep.subr.mxu0 0.0
    %1403 = vmatpush2.msra.mxu0 0.0
    %1404 = vmatprep.subr.mxu0 0.0
    %1405 = vmatpush2.msra.mxu0 0.0
    %1406 = vmatprep.subr.mxu0 0.0
    %1407 = vmatpush2.msra.mxu0 0.0
    %1408 = vmatprep.subr.mxu0 0.0
    %1409 = vmatpush2.msra.mxu0 0.0
    %1410 = vmatprep.subr.mxu0 0.0
    %1411 = vmatpush2.msra.mxu0 0.0
    %1412 = vmatprep.subr.mxu0 0.0
    %1413 = vmatpush2.msra.mxu0 0.0
    %1414 = vmatprep.subr.mxu0 0.0
    %1415 = vmatpush2.msra.mxu0 0.0
    %1416 = vmatprep.subr.mxu0 0.0
    %1417 = vmatpush2.msra.mxu0 0.0
    %1418 = vmatprep.subr.mxu0 0.0
    %1419 = vmatpush2.msra.mxu0 0.0
    %1420 = vmatprep.subr.mxu0 0.0
    %1421 = vmatpush2.msra.mxu0 0.0
    %1422 = vmatprep.subr.mxu0 0.0
    %1423 = vmatpush2.msra.mxu0 0.0
    %1424 = vmatprep.subr.mxu0 0.0
    %1425 = vmatpush2.msra.mxu0 0.0
    %1426 = vmatprep.subr.mxu0 0.0
    %1427 = vmatpush2.msra.mxu0 0.0
    %1428 = vmatprep.mubr.f32.mxu0 0.0
    %1429 = vmatmul.mubr.f32.gmra.mxu0 %v1362
    %v1430 = vpop.f32.mrf.mxu0
    %v1431 = vadd.f32 %v1359, %v1430
    %v1432 = vpop.f32.mrf.mxu0
    %1433 = vdwg.mxu0
    %s1434 = scalar_lea.vmem [#allocation5], 24
    %1435 = vst.msk [vmem:[%s1434] sm:$0xff] %vm384, %v1431
    // Predicated region
    $region34: #{tpu_custom_call.1} parent=1 // pred_check
      _
    $region35: #{tpu_custom_call.1} parent=1 // pred_check_branch
      %1437 = sbr.rel (0) target = $region37
    $region36: #{tpu_custom_call.1} parent=1 // pred_region
      %s1439 = ssub.s32 512, 512
      %1440 = vsyncadd [#allocation4], %s1439
      %s1441 = sshll.u32 [#allocation5], 4
      %s1442 = int_to_ptr.vmem [resolvable:$true] %s1441
      %1447 = dma.vmem_to_hbm [thread:$0]  %s1442, 512, %s7, [#allocation4], 128, 128, 8
    $region37: #{tpu_custom_call.1} parent=1 // pred_fallthru
      _
    // Predicated region
    $region38: #{tpu_custom_call.1} parent=1 // pred_check
      _
    $region39: #{tpu_custom_call.1} parent=1 // pred_check_branch
      %1449 = sbr.rel (0) target = $region41
    $region40: #{tpu_custom_call.1} parent=1 // pred_region
      %1450 = dma.done [#allocation4], 512
    $region41: #{tpu_custom_call.1} parent=1 // pred_fallthru
      _
    %1451 = vsyncpa [#allocation3], 1
    %1452 = vsyncpa [#allocation4], 1

</llo_original>
